<compile_context>
chip_gen: v7x
topology: tpu7x:2x2x1
jax: 0.10.0
libtpu: 0.0.40
codegen_flags: <defaults>
</compile_context>

<pallas_src>
import functools

import jax
import jax.numpy as jnp
from jax.experimental import pallas as pl
from jax.experimental.pallas import tpu as pltpu


# ----------------------------------------------------------------------------
# Kernels
# ----------------------------------------------------------------------------
def _make_layer_kernel(*, last_layer, inv_scale):
    """One K-tiled LightGCN propagation layer.

    Per grid point (i, k):
      g_ref:       (TM, TK) bf16   tile of the normalized adjacency (streamed)
      e_ref:       (TK, D)  bf16   tile of the previous-layer embeddings
      acc_in_ref:  (TM, D)  f32    running sum of layer embeddings (aliased)
      [e_out_ref]: (TM, D)  bf16   e_{l+1} row tile (omitted on the last layer)
      acc_out_ref: (TM, D)  f32    updated running sum (scaled on last layer)
      mm_ref:      (TM, D)  f32    VMEM scratch accumulator for G @ E
    """
    if last_layer:

        def kernel(g_ref, e_ref, acc_in_ref, acc_out_ref, mm_ref):
            k = pl.program_id(1)

            @pl.when(k == 0)
            def _():
                mm_ref[...] = jnp.zeros_like(mm_ref)

            mm_ref[...] += jnp.dot(g_ref[...], e_ref[...],
                                   preferred_element_type=jnp.float32)

            @pl.when(k == pl.num_programs(1) - 1)
            def _():
                # Fuse the layer-mean's 1/(n_layers + 1) into the final write;
                # e_{L} itself is never materialized (nothing reads it).
                acc_out_ref[...] = (acc_in_ref[...] + mm_ref[...]) * inv_scale

        return kernel

    def kernel(g_ref, e_ref, acc_in_ref, e_out_ref, acc_out_ref, mm_ref):
        k = pl.program_id(1)

        @pl.when(k == 0)
        def _():
            mm_ref[...] = jnp.zeros_like(mm_ref)

        mm_ref[...] += jnp.dot(g_ref[...], e_ref[...],
                               preferred_element_type=jnp.float32)

        @pl.when(k == pl.num_programs(1) - 1)
        def _():
            e_new = mm_ref[...]
            e_out_ref[...] = e_new.astype(e_out_ref.dtype)
            acc_out_ref[...] = acc_in_ref[...] + e_new

    return kernel


# ----------------------------------------------------------------------------
# Tiling / VMEM budget helpers
# ----------------------------------------------------------------------------
def _default_vmem_limit_bytes():
    """~70% of this generation's physical VMEM (44 MiB on v7x, ~90 MiB v5e/v6e)."""
    try:
        cap = int(pltpu.get_tpu_info().vmem_capacity_bytes)
    except Exception:
        cap = 64 * 1024 * 1024  # assume the tightest case (v7x, 64 MiB per TC)
    return int(cap * 0.7)


def _pick_block(total, target):
    """Largest multiple of 128 that divides `total` and is <= target."""
    b = max(128, (min(target, total) // 128) * 128)
    while total % b:
        b -= 128
    return b


def _choose_tiles(np_rows, d, vmem_limit_bytes):
    """TM targets 512 (fills the 256-wide MXU), TK targets 4096 (amortizes the
    ~0.35us per-step overhead against the G DMA); both 128-aligned divisors of
    the padded N, shrunk until the VMEM model fits the budget."""
    tm = _pick_block(np_rows, 512)
    tk = _pick_block(np_rows, 4096)

    def vmem_bytes(tm_, tk_):
        g = 2 * tm_ * tk_ * 2            # G tile, bf16, double-buffered
        e = 2 * tk_ * d * 2              # E_l tile, bf16, double-buffered
        acc_in = 2 * tm_ * d * 4         # running sum in
        outs = 2 * (tm_ * d * 2 + tm_ * d * 4)  # e_out + acc_out
        scratch = tm_ * d * 4            # f32 matmul accumulator
        return g + e + acc_in + outs + scratch

    budget = int(vmem_limit_bytes * 0.8)  # headroom for Mosaic internal scratch
    while vmem_bytes(tm, tk) > budget and tk > 128:
        tk = _pick_block(np_rows, tk - 128)
    while vmem_bytes(tm, tk) > budget and tm > 128:
        tm = _pick_block(np_rows, tm - 128)
    return tm, tk


# ----------------------------------------------------------------------------
# Per-layer pallas_call wrapper
# ----------------------------------------------------------------------------
def _layer_call(graph_bf16, e_bf16, acc, *, tm, tk, last_layer, inv_scale,
                vmem_limit_bytes):
    np_rows, d = acc.shape
    grid = (np_rows // tm, np_rows // tk)

    in_specs = [
        # G tile: streamed, double-buffered by the pipeline.
        pl.BlockSpec((tm, tk), lambda i, k: (i, k)),
        # E_l tile: varies with k only.
        pl.BlockSpec((tk, d), lambda i, k: (k, 0)),
        # Running-sum row tile: constant over k, fetched once per row block.
        pl.BlockSpec((tm, d), lambda i, k: (i, 0)),
    ]
    scratch = [pltpu.VMEM((tm, d), jnp.float32)]
    compiler_params = pltpu.CompilerParams(
        # Row blocks are independent -> shard across TensorCores on v7x.
        # K is the reduction axis (accumulator in scratch) -> arbitrary, last.
        dimension_semantics=("parallel", "arbitrary"),
        vmem_limit_bytes=int(vmem_limit_bytes),
    )

    if last_layer:
        return pl.pallas_call(
            _make_layer_kernel(last_layer=True, inv_scale=inv_scale),
            out_shape=jax.ShapeDtypeStruct((np_rows, d), jnp.float32),
            grid_spec=pltpu.PrefetchScalarGridSpec(
                num_scalar_prefetch=0,
                grid=grid,
                in_specs=in_specs,
                out_specs=pl.BlockSpec((tm, d), lambda i, k: (i, 0)),
                scratch_shapes=scratch),
            compiler_params=compiler_params,
            input_output_aliases={2: 0},   # running sum updated in place
        )(graph_bf16, e_bf16, acc)

    return pl.pallas_call(
        _make_layer_kernel(last_layer=False, inv_scale=inv_scale),
        out_shape=(
            jax.ShapeDtypeStruct((np_rows, d), jnp.bfloat16),  # e_{l+1}
            jax.ShapeDtypeStruct((np_rows, d), jnp.float32),   # running sum
        ),
        grid_spec=pltpu.PrefetchScalarGridSpec(
            num_scalar_prefetch=0,
            grid=grid,
            in_specs=in_specs,
            out_specs=[
                pl.BlockSpec((tm, d), lambda i, k: (i, 0)),
                pl.BlockSpec((tm, d), lambda i, k: (i, 0)),
            ],
            scratch_shapes=scratch),
        compiler_params=compiler_params,
        input_output_aliases={2: 1},       # running sum updated in place
    )(graph_bf16, e_bf16, acc)


def _propagation_layers(graph_bf16, e0, *, n_layers, tm, tk, vmem_limit_bytes):
    """Runs n_layers of G @ E plus the fused running-sum / layer-mean."""
    inv_scale = 1.0 / float(n_layers + 1)
    e_bf16 = e0.astype(jnp.bfloat16)   # bf16 MXU operand
    acc = e0                           # f32 running sum starts at e0
    for _ in range(n_layers - 1):
        e_bf16, acc = _layer_call(
            graph_bf16, e_bf16, acc, tm=tm, tk=tk, last_layer=False,
            inv_scale=inv_scale, vmem_limit_bytes=vmem_limit_bytes)
    return _layer_call(
        graph_bf16, e_bf16, acc, tm=tm, tk=tk, last_layer=True,
        inv_scale=inv_scale, vmem_limit_bytes=vmem_limit_bytes)


_propagation_layers_jit = jax.jit(
    _propagation_layers,
    static_argnames=("n_layers", "tm", "tk", "vmem_limit_bytes"),
)


# ----------------------------------------------------------------------------
# Public forward
# ----------------------------------------------------------------------------
def lightgcn_forward(graph, user_emb, item_emb, n_layers, *, row_tile=None,
                     col_tile=None, vmem_limit_bytes=None):
    """LightGCN propagation + layer-mean via K-tiled per-layer Pallas kernels.

    graph:    (N, N) dense normalized adjacency (f32)
    user_emb: (num_users, D) f32
    item_emb: (num_items, D) f32
    Returns (users_out, items_out) matching torch.split(light_out, [U, I]).
    """
    num_users, d = user_emb.shape
    num_items = item_emb.shape[0]
    n = num_users + num_items
    assert graph.shape == (n, n)

    if vmem_limit_bytes is None:
        vmem_limit_bytes = _default_vmem_limit_bytes()

    e0 = jnp.concatenate([user_emb, item_emb], axis=0).astype(jnp.float32)
    if n_layers == 0:
        return e0[:num_users], e0[num_users:]

    # Pad N to a multiple of 128: lane-dense G tiles, 16-aligned bf16 sublanes,
    # and 128-aligned MXU K feeds.  Padded rows/cols are zero -> no effect.
    pad = (-n) % 128
    np_rows = n + pad
    graph_f32 = graph.astype(jnp.float32)
    graph_p = jnp.pad(graph_f32, ((0, pad), (0, pad))) if pad else graph_f32
    e0_p = jnp.pad(e0, ((0, pad), (0, 0))) if pad else e0

    tm_auto, tk_auto = _choose_tiles(np_rows, d, vmem_limit_bytes)
    tm = row_tile if row_tile is not None else tm_auto
    tk = col_tile if col_tile is not None else tk_auto
    assert tm % 128 == 0 and np_rows % tm == 0, (tm, np_rows)
    assert tk % 128 == 0 and np_rows % tk == 0, (tk, np_rows)

    # bf16 G halves HBM traffic; the kernel is memory-bound on streaming G.
    graph_bf16 = graph_p.astype(jnp.bfloat16)

    acc = _propagation_layers_jit(
        graph_bf16, e0_p,
        n_layers=n_layers, tm=tm, tk=tk,
        vmem_limit_bytes=int(vmem_limit_bytes))

    out = acc[:n]
    return out[:num_users], out[num_users:]


# ----------------------------------------------------------------------------
# Deterministic test inputs + pure-JAX reference
# ----------------------------------------------------------------------------
def _xavier_uniform(key, shape, gain):
    # Matches torch.nn.init.xavier_uniform_ for a 2D (fan_out, fan_in) matrix.
    fan_out, fan_in = shape
    bound = gain * jnp.sqrt(6.0 / (fan_in + fan_out))
    return jax.random.uniform(key, shape, jnp.float32, -bound, bound)


def _make_normalized_graph(key, n):
    # Synthetic symmetric adjacency with D^-1/2 A D^-1/2 normalization
    # (the standard LightGCN graph), materialized densely.
    a = (jax.random.uniform(key, (n, n)) < 0.2).astype(jnp.float32)
    a = jnp.maximum(a, a.T)
    a = a * (1.0 - jnp.eye(n, dtype=jnp.float32))
    deg = jnp.sum(a, axis=1)
    d_inv_sqrt = jnp.where(deg > 0, 1.0 / jnp.sqrt(jnp.maximum(deg, 1e-12)), 0.0)
    return a * d_inv_sqrt[:, None] * d_inv_sqrt[None, :]


def _reference_forward(graph, user_emb, item_emb, n_layers):
    all_emb = jnp.concatenate([user_emb, item_emb], axis=0)
    embs = [all_emb]
    cur = all_emb
    for _ in range(n_layers):
        cur = graph @ cur
        embs.append(cur)
    light_out = jnp.mean(jnp.stack(embs, axis=1), axis=1)
    return light_out[: user_emb.shape[0]], light_out[user_emb.shape[0]:]


if __name__ == "__main__":
    num_users = 64
    num_items = 192
    hid_dim = 128
    n_layers = 3
    N = num_users + num_items   # 256 -> multiple of 128, no padding needed

    key = jax.random.PRNGKey(0)
    k_user, k_item, k_graph = jax.random.split(key, 3)

    user_emb = _xavier_uniform(k_user, (num_users, hid_dim), gain=1.414)
    item_emb = _xavier_uniform(k_item, (num_items, hid_dim), gain=1.414)
    graph = _make_normalized_graph(k_graph, N)

    # row_tile/col_tile = 128 exercises a (2, 2) grid: parallel row blocks plus
    # the K-reduction (scratch accumulator + pl.when init/finalize) path.
    users_out, items_out = lightgcn_forward(
        graph, user_emb, item_emb, n_layers, row_tile=128, col_tile=128)
    users_out = jax.block_until_ready(users_out)
    items_out = jax.block_until_ready(items_out)

    # Correctness check against the plain-JAX f32 reference of the PyTorch forward.
    ref_u, ref_i = _reference_forward(graph, user_emb, item_emb, n_layers)
    assert users_out.shape == (num_users, hid_dim)
    assert items_out.shape == (num_items, hid_dim)
    # bf16 graph/embedding MXU inputs with f32 accumulation -> looser tolerance.
    assert jnp.allclose(users_out, ref_u, atol=2e-2, rtol=2e-2)
    assert jnp.allclose(items_out, ref_i, atol=2e-2, rtol=2e-2)

    print("KERNEL_OK")
</pallas_src>

<mosaic_0001>
module attributes {stable_mosaic.version = 11 : i64} {
  func.func @kernel(%arg0: i32, %arg1: i32, %arg2: memref<128x128xbf16, #tpu.memory_space<vmem>>, %arg3: memref<128x128xbf16, #tpu.memory_space<vmem>>, %arg4: memref<128x128xf32, #tpu.memory_space<vmem>>, %arg5: memref<128x128xf32, #tpu.memory_space<vmem>>, %arg6: memref<128x128xf32, #tpu.memory_space<vmem>>) attributes {dimension_semantics = [#tpu.dimension_semantics<parallel>, #tpu.dimension_semantics<arbitrary>], iteration_bounds = array<i64: 2, 2>, scalar_prefetch = 0 : i64, scratch_operands = 1 : i64, tpu.core_type = #tpu.core_type<tc>, window_params = [{transform_indices = @transform_0, window_bounds = array<i64: 128, 128>}, {transform_indices = @transform_1, window_bounds = array<i64: 128, 128>}, {transform_indices = @transform_2, window_bounds = array<i64: 128, 128>}, {transform_indices = @transform_3, window_bounds = array<i64: 128, 128>}]} {
    %c0_i32 = arith.constant 0 : i32
    %0 = arith.cmpi eq, %arg1, %c0_i32 : i32
    %1 = arith.extui %0 : i1 to i32
    %c0_i32_0 = arith.constant 0 : i32
    %2 = arith.cmpi ne, %1, %c0_i32_0 : i32
    scf.if %2 {
      %cst_9 = arith.constant 0.000000e+00 : f32
      %12 = vector.broadcast %cst_9 : f32 to vector<128x128xf32>
      %c0_10 = arith.constant 0 : index
      %c0_11 = arith.constant 0 : index
      %13 = vector.load %arg6[%c0_10, %c0_11] : memref<128x128xf32, #tpu.memory_space<vmem>>, vector<128x128xf32>
      tpu.vector_store %arg6[%c0_10, %c0_11], %12 {strides = array<i32>} : memref<128x128xf32, #tpu.memory_space<vmem>>, vector<128x128xf32>,
    } else {
    }
    %c0 = arith.constant 0 : index
    %c0_1 = arith.constant 0 : index
    %3 = vector.load %arg6[%c0, %c0_1] : memref<128x128xf32, #tpu.memory_space<vmem>>, vector<128x128xf32>
    %c0_2 = arith.constant 0 : index
    %c0_3 = arith.constant 0 : index
    %4 = vector.load %arg2[%c0_2, %c0_3] : memref<128x128xbf16, #tpu.memory_space<vmem>>, vector<128x128xbf16>
    %c0_4 = arith.constant 0 : index
    %c0_5 = arith.constant 0 : index
    %5 = vector.load %arg3[%c0_4, %c0_5] : memref<128x128xbf16, #tpu.memory_space<vmem>>, vector<128x128xbf16>
    %cst = arith.constant dense<0.000000e+00> : vector<128x128xf32>
    %6 = tpu.matmul %4, %5, %cst {dimension_numbers = #tpu.dot_dimension_numbers<[1], [0], [0], [1], [0, 0, 1, 1], [], []>} : vector<128x128xbf16>, vector<128x128xbf16>, vector<128x128xf32> -> vector<128x128xf32>
    %7 = arith.addf %3, %6 : vector<128x128xf32>
    %c0_6 = arith.constant 0 : index
    %c0_7 = arith.constant 0 : index
    %8 = vector.load %arg6[%c0_6, %c0_7] : memref<128x128xf32, #tpu.memory_space<vmem>>, vector<128x128xf32>
    tpu.vector_store %arg6[%c0_6, %c0_7], %7 {strides = array<i32>} : memref<128x128xf32, #tpu.memory_space<vmem>>, vector<128x128xf32>,
    %c1_i32 = arith.constant 1 : i32
    %9 = arith.cmpi eq, %arg1, %c1_i32 : i32
    %10 = arith.extui %9 : i1 to i32
    %c0_i32_8 = arith.constant 0 : i32
    %11 = arith.cmpi ne, %10, %c0_i32_8 : i32
    scf.if %11 {
      %c0_9 = arith.constant 0 : index
      %c0_10 = arith.constant 0 : index
      %12 = vector.load %arg4[%c0_9, %c0_10] : memref<128x128xf32, #tpu.memory_space<vmem>>, vector<128x128xf32>
      %c0_11 = arith.constant 0 : index
      %c0_12 = arith.constant 0 : index
      %13 = vector.load %arg6[%c0_11, %c0_12] : memref<128x128xf32, #tpu.memory_space<vmem>>, vector<128x128xf32>
      %14 = arith.addf %12, %13 : vector<128x128xf32>
      %cst_13 = arith.constant 2.500000e-01 : f32
      %15 = vector.broadcast %cst_13 : f32 to vector<128x128xf32>
      %16 = arith.mulf %14, %15 : vector<128x128xf32>
      %c0_14 = arith.constant 0 : index
      %c0_15 = arith.constant 0 : index
      %17 = vector.load %arg5[%c0_14, %c0_15] : memref<128x128xf32, #tpu.memory_space<vmem>>, vector<128x128xf32>
      tpu.vector_store %arg5[%c0_14, %c0_15], %16 {strides = array<i32>} : memref<128x128xf32, #tpu.memory_space<vmem>>, vector<128x128xf32>,
    } else {
    }
    return
  }
  func.func @transform_0(%arg0: i32, %arg1: i32) -> (i32, i32) {
    %c0_i32 = arith.constant 0 : i32
    return %arg0, %arg1 : i32, i32
  }
  func.func @transform_1(%arg0: i32, %arg1: i32) -> (i32, i32) {
    %c0_i32 = arith.constant 0 : i32
    %c0_i32_0 = arith.constant 0 : i32
    return %arg1, %c0_i32 : i32, i32
  }
  func.func @transform_2(%arg0: i32, %arg1: i32) -> (i32, i32) {
    %c0_i32 = arith.constant 0 : i32
    %c0_i32_0 = arith.constant 0 : i32
    return %arg0, %c0_i32 : i32, i32
  }
  func.func @transform_3(%arg0: i32, %arg1: i32) -> (i32, i32) {
    %c0_i32 = arith.constant 0 : i32
    %c0_i32_0 = arith.constant 0 : i32
    return %arg0, %c0_i32 : i32, i32
  }
}

module attributes {stable_mosaic.version = 11 : i64} {
  func.func @kernel(%arg0: i32, %arg1: i32, %arg2: memref<128x128xbf16, #tpu.memory_space<vmem>>, %arg3: memref<128x128xbf16, #tpu.memory_space<vmem>>, %arg4: memref<128x128xf32, #tpu.memory_space<vmem>>, %arg5: memref<128x128xbf16, #tpu.memory_space<vmem>>, %arg6: memref<128x128xf32, #tpu.memory_space<vmem>>, %arg7: memref<128x128xf32, #tpu.memory_space<vmem>>) attributes {dimension_semantics = [#tpu.dimension_semantics<parallel>, #tpu.dimension_semantics<arbitrary>], iteration_bounds = array<i64: 2, 2>, scalar_prefetch = 0 : i64, scratch_operands = 1 : i64, tpu.core_type = #tpu.core_type<tc>, window_params = [{transform_indices = @transform_0, window_bounds = array<i64: 128, 128>}, {transform_indices = @transform_1, window_bounds = array<i64: 128, 128>}, {transform_indices = @transform_2, window_bounds = array<i64: 128, 128>}, {transform_indices = @transform_3, window_bounds = array<i64: 128, 128>}, {transform_indices = @transform_4, window_bounds = array<i64: 128, 128>}]} {
    %c0_i32 = arith.constant 0 : i32
    %0 = arith.cmpi eq, %arg1, %c0_i32 : i32
    %1 = arith.extui %0 : i1 to i32
    %c0_i32_0 = arith.constant 0 : i32
    %2 = arith.cmpi ne, %1, %c0_i32_0 : i32
    scf.if %2 {
      %cst_9 = arith.constant 0.000000e+00 : f32
      %12 = vector.broadcast %cst_9 : f32 to vector<128x128xf32>
      %c0_10 = arith.constant 0 : index
      %c0_11 = arith.constant 0 : index
      %13 = vector.load %arg7[%c0_10, %c0_11] : memref<128x128xf32, #tpu.memory_space<vmem>>, vector<128x128xf32>
      tpu.vector_store %arg7[%c0_10, %c0_11], %12 {strides = array<i32>} : memref<128x128xf32, #tpu.memory_space<vmem>>, vector<128x128xf32>,
    } else {
    }
    %c0 = arith.constant 0 : index
    %c0_1 = arith.constant 0 : index
    %3 = vector.load %arg7[%c0, %c0_1] : memref<128x128xf32, #tpu.memory_space<vmem>>, vector<128x128xf32>
    %c0_2 = arith.constant 0 : index
    %c0_3 = arith.constant 0 : index
    %4 = vector.load %arg2[%c0_2, %c0_3] : memref<128x128xbf16, #tpu.memory_space<vmem>>, vector<128x128xbf16>
    %c0_4 = arith.constant 0 : index
    %c0_5 = arith.constant 0 : index
    %5 = vector.load %arg3[%c0_4, %c0_5] : memref<128x128xbf16, #tpu.memory_space<vmem>>, vector<128x128xbf16>
    %cst = arith.constant dense<0.000000e+00> : vector<128x128xf32>
    %6 = tpu.matmul %4, %5, %cst {dimension_numbers = #tpu.dot_dimension_numbers<[1], [0], [0], [1], [0, 0, 1, 1], [], []>} : vector<128x128xbf16>, vector<128x128xbf16>, vector<128x128xf32> -> vector<128x128xf32>
    %7 = arith.addf %3, %6 : vector<128x128xf32>
    %c0_6 = arith.constant 0 : index
    %c0_7 = arith.constant 0 : index
    %8 = vector.load %arg7[%c0_6, %c0_7] : memref<128x128xf32, #tpu.memory_space<vmem>>, vector<128x128xf32>
    tpu.vector_store %arg7[%c0_6, %c0_7], %7 {strides = array<i32>} : memref<128x128xf32, #tpu.memory_space<vmem>>, vector<128x128xf32>,
    %c1_i32 = arith.constant 1 : i32
    %9 = arith.cmpi eq, %arg1, %c1_i32 : i32
    %10 = arith.extui %9 : i1 to i32
    %c0_i32_8 = arith.constant 0 : i32
    %11 = arith.cmpi ne, %10, %c0_i32_8 : i32
    scf.if %11 {
      %c0_9 = arith.constant 0 : index
      %c0_10 = arith.constant 0 : index
      %12 = vector.load %arg7[%c0_9, %c0_10] : memref<128x128xf32, #tpu.memory_space<vmem>>, vector<128x128xf32>
      %13 = arith.truncf %12 : vector<128x128xf32> to vector<128x128xbf16>
      %c0_11 = arith.constant 0 : index
      %c0_12 = arith.constant 0 : index
      %14 = vector.load %arg5[%c0_11, %c0_12] : memref<128x128xbf16, #tpu.memory_space<vmem>>, vector<128x128xbf16>
      tpu.vector_store %arg5[%c0_11, %c0_12], %13 {strides = array<i32>} : memref<128x128xbf16, #tpu.memory_space<vmem>>, vector<128x128xbf16>,
      %c0_13 = arith.constant 0 : index
      %c0_14 = arith.constant 0 : index
      %15 = vector.load %arg4[%c0_13, %c0_14] : memref<128x128xf32, #tpu.memory_space<vmem>>, vector<128x128xf32>
      %16 = arith.addf %15, %12 : vector<128x128xf32>
      %c0_15 = arith.constant 0 : index
      %c0_16 = arith.constant 0 : index
      %17 = vector.load %arg6[%c0_15, %c0_16] : memref<128x128xf32, #tpu.memory_space<vmem>>, vector<128x128xf32>
      tpu.vector_store %arg6[%c0_15, %c0_16], %16 {strides = array<i32>} : memref<128x128xf32, #tpu.memory_space<vmem>>, vector<128x128xf32>,
    } else {
    }
    return
  }
  func.func @transform_0(%arg0: i32, %arg1: i32) -> (i32, i32) {
    %c0_i32 = arith.constant 0 : i32
    return %arg0, %arg1 : i32, i32
  }
  func.func @transform_1(%arg0: i32, %arg1: i32) -> (i32, i32) {
    %c0_i32 = arith.constant 0 : i32
    %c0_i32_0 = arith.constant 0 : i32
    return %arg1, %c0_i32 : i32, i32
  }
  func.func @transform_2(%arg0: i32, %arg1: i32) -> (i32, i32) {
    %c0_i32 = arith.constant 0 : i32
    %c0_i32_0 = arith.constant 0 : i32
    return %arg0, %c0_i32 : i32, i32
  }
  func.func @transform_3(%arg0: i32, %arg1: i32) -> (i32, i32) {
    %c0_i32 = arith.constant 0 : i32
    %c0_i32_0 = arith.constant 0 : i32
    return %arg0, %c0_i32 : i32, i32
  }
  func.func @transform_4(%arg0: i32, %arg1: i32) -> (i32, i32) {
    %c0_i32 = arith.constant 0 : i32
    %c0_i32_0 = arith.constant 0 : i32
    return %arg0, %c0_i32 : i32, i32
  }
}

</mosaic_0001>

<llo_original>
// kernel: _propagation_layers.3
$region0: #{_propagation_layers.3}
  #allocation0 [shape = 'u32[]', space=smem, size = 0x4, offset = 0x4, fixed_abs, tag = 'smem constant byte address 0x4 - core index']
  #allocation1 [shape = 'u32[144,128]{1,0:T(1,128)}', space=vmem, size = 0x12000, scoped, tag = 'internal scratch']
  #allocation2 [shape = 'f32[128,128]{1,0:T(8,128)}', space=vmem, size = 0x10000, scoped, tag = 'scratch operand']
  %s0 = inlined_call_operand.vmem [shape: bf16[256,256], index: 0, kind: input, shape index: {}]
  %s1 = inlined_call_operand.vmem [shape: bf16[256,128], index: 1, kind: input, shape index: {}]
  %s2 = inlined_call_operand.vmem [shape: f32[256,128], index: 2, kind: input, shape index: {}, may-alias: {2,4}]
  %s3 = inlined_call_operand.vmem [shape: bf16[256,128], index: 3, kind: output, shape index: {0}]
  %s4 = inlined_call_operand.vmem [shape: f32[256,128], index: 4, kind: output, shape index: {1}, may-alias: {2,4}]
  %5 = xla_tuple %s3, %s4
  %s6 = sld [smem:[#allocation0]]
  $region102: #{_propagation_layers.3} parent=0
    _
  %s8 = ssub.s32 1, %s6
  %s9 = scalar_select 0, %s8, %s6
  $region1: #{_propagation_layers.3} parent=0
    #allocation3 [shape = 'u8[65536]{0}', space=vmem, size = 0x10000, scoped, tag = 'input window, operand 0']
    loop: start=0, step=1, limit=6
    $region2: #{_propagation_layers.3} parent=1 // loop_pre_header
      _
    $region3: #{_propagation_layers.3} parent=1 // loop_header
      %s11 = sphi 0, %s15
      %p12 = scmp.ge.s32.totalorder %s11, 6
      %s18 = sphi 0, %s30
      %s19 = sphi 0, %s26
      %s20 = sphi 0, %s18
      %s21 = sphi 0, %s19
      %s22 = sphi 0, %s20
      %s23 = sphi 0, %s21
      %s35 = sphi 0, %s37
      %s38 = sphi 0, %s35
      %s39 = sphi 0, %s38
      %s55 = sphi 0, %s39
      %s61 = sphi 0, %s63
      %s64 = sphi 0, %s61
      %s65 = sphi 0, %s64
      %s81 = sphi 0, %s65
      %s87 = sphi 0, %s89
      %s90 = sphi 0, %s87
      %s91 = sphi 0, %s90
      %s107 = sphi 0, %s91
      %s113 = sphi 0, %s115
      %s116 = sphi 0, %s113
      %s117 = sphi 0, %s116
      %s133 = sphi 0, %s117
      %s139 = sphi 0, %s141
      %s142 = sphi 0, %s139
      %s143 = sphi 0, %s142
      %s159 = sphi 0, %s143
    $region4: #{_propagation_layers.3} parent=1 // loop_header_branch
      %14 = sbr.rel (%p12) target = $region8
    $region5: #{_propagation_layers.3} parent=1 // loop_body
      %s16 = ssub.s32 %s11, 1
      %s17 = ssub.s32 %s11, 2
      %s24 = sadd.s32 1, %s19
      %p25 = scmp.ge.s32.totalorder %s24, 2
      %s26 = scalar_select %p25, 0, %s24
      %s27 = sadd.s32 1, %s18
      %s28 = scalar_select %p25, %s27, %s18
      %p29 = scmp.ge.s32.totalorder %s28, 2
      %s30 = scalar_select %p29, 0, %s28
      %s31 = ssub.s32 %s18, %s30
      %s32 = ssub.s32 %s19, %s26
      %s33 = sor.u32 %s31, %s32
      %p34 = scmp.eq.s32.totalorder %s33, 0
      %s36 = sadd.s32 %s35, 1
      %s37 = scalar_select %p34, %s35, %s36
      %p40 = pneg %p34
      %p41 = scmp.eq.s32.totalorder %s11, 3
      %p42 = por %p40, %p41
      %p43 = scmp.ne.s32.totalorder %s35, %s38
      %p44 = scmp.eq.s32.totalorder %s11, 0
      %p45 = por %p43, %p44
      %p46 = scmp.ne.s32.totalorder %s35, %s38
      %p47 = scmp.eq.s32.totalorder %s16, 3
      %p48 = por %p46, %p47
      %p49 = scmp.ne.s32.totalorder %s38, %s39
      %p50 = scmp.eq.s32.totalorder %s16, 0
      %p51 = por %p49, %p50
      %p52 = scmp.ne.s32.totalorder %s38, %s39
      %p53 = scmp.eq.s32.totalorder %s17, 3
      %p54 = por %p52, %p53
      %p56 = scmp.ne.s32.totalorder %s39, %s55
      %p57 = scmp.eq.s32.totalorder %s17, 0
      %p58 = por %p56, %p57
      %s59 = ssub.s32 %s19, %s26
      %p60 = scmp.eq.s32.totalorder %s59, 0
      %s62 = sadd.s32 %s61, 1
      %s63 = scalar_select %p60, %s61, %s62
      %p66 = pneg %p60
      %p67 = scmp.eq.s32.totalorder %s11, 3
      %p68 = por %p66, %p67
      %p69 = scmp.ne.s32.totalorder %s61, %s64
      %p70 = scmp.eq.s32.totalorder %s11, 0
      %p71 = por %p69, %p70
      %p72 = scmp.ne.s32.totalorder %s61, %s64
      %p73 = scmp.eq.s32.totalorder %s16, 3
      %p74 = por %p72, %p73
      %p75 = scmp.ne.s32.totalorder %s64, %s65
      %p76 = scmp.eq.s32.totalorder %s16, 0
      %p77 = por %p75, %p76
      %p78 = scmp.ne.s32.totalorder %s64, %s65
      %p79 = scmp.eq.s32.totalorder %s17, 3
      %p80 = por %p78, %p79
      %p82 = scmp.ne.s32.totalorder %s65, %s81
      %p83 = scmp.eq.s32.totalorder %s17, 0
      %p84 = por %p82, %p83
      %s85 = ssub.s32 %s18, %s30
      %p86 = scmp.eq.s32.totalorder %s85, 0
      %s88 = sadd.s32 %s87, 1
      %s89 = scalar_select %p86, %s87, %s88
      %p92 = pneg %p86
      %p93 = scmp.eq.s32.totalorder %s11, 3
      %p94 = por %p92, %p93
      %p95 = scmp.ne.s32.totalorder %s87, %s90
      %p96 = scmp.eq.s32.totalorder %s11, 0
      %p97 = por %p95, %p96
      %p98 = scmp.ne.s32.totalorder %s87, %s90
      %p99 = scmp.eq.s32.totalorder %s16, 3
      %p100 = por %p98, %p99
      %p101 = scmp.ne.s32.totalorder %s90, %s91
      %p102 = scmp.eq.s32.totalorder %s16, 0
      %p103 = por %p101, %p102
      %p104 = scmp.ne.s32.totalorder %s90, %s91
      %p105 = scmp.eq.s32.totalorder %s17, 3
      %p106 = por %p104, %p105
      %p108 = scmp.ne.s32.totalorder %s91, %s107
      %p109 = scmp.eq.s32.totalorder %s17, 0
      %p110 = por %p108, %p109
      %s111 = ssub.s32 %s18, %s30
      %p112 = scmp.eq.s32.totalorder %s111, 0
      %s114 = sadd.s32 %s113, 1
      %s115 = scalar_select %p112, %s113, %s114
      %p118 = pneg %p112
      %p119 = scmp.eq.s32.totalorder %s11, 3
      %p120 = por %p118, %p119
      %p121 = scmp.ne.s32.totalorder %s113, %s116
      %p122 = scmp.eq.s32.totalorder %s11, 0
      %p123 = por %p121, %p122
      %p124 = scmp.ne.s32.totalorder %s113, %s116
      %p125 = scmp.eq.s32.totalorder %s16, 3
      %p126 = por %p124, %p125
      %p127 = scmp.ne.s32.totalorder %s116, %s117
      %p128 = scmp.eq.s32.totalorder %s16, 0
      %p129 = por %p127, %p128
      %p130 = scmp.ne.s32.totalorder %s116, %s117
      %p131 = scmp.eq.s32.totalorder %s17, 3
      %p132 = por %p130, %p131
      %p134 = scmp.ne.s32.totalorder %s117, %s133
      %p135 = scmp.eq.s32.totalorder %s17, 0
      %p136 = por %p134, %p135
      %s137 = ssub.s32 %s18, %s30
      %p138 = scmp.eq.s32.totalorder %s137, 0
      %s140 = sadd.s32 %s139, 1
      %s141 = scalar_select %p138, %s139, %s140
      %p144 = pneg %p138
      %p145 = scmp.eq.s32.totalorder %s11, 3
      %p146 = por %p144, %p145
      %p147 = scmp.ne.s32.totalorder %s139, %s142
      %p148 = scmp.eq.s32.totalorder %s11, 0
      %p149 = por %p147, %p148
      %p150 = scmp.ne.s32.totalorder %s139, %s142
      %p151 = scmp.eq.s32.totalorder %s16, 3
      %p152 = por %p150, %p151
      %p153 = scmp.ne.s32.totalorder %s142, %s143
      %p154 = scmp.eq.s32.totalorder %s16, 0
      %p155 = por %p153, %p154
      %p156 = scmp.ne.s32.totalorder %s142, %s143
      %p157 = scmp.eq.s32.totalorder %s17, 3
      %p158 = por %p156, %p157
      %p160 = scmp.ne.s32.totalorder %s143, %s159
      %p161 = scmp.eq.s32.totalorder %s17, 0
      %p162 = por %p160, %p161
      %p163 = scmp.le.s32.totalorder 1, %s11
      %p164 = scmp.lt.s32.totalorder %s11, 5
      %p165 = pnand %p163, %p164
      %p166 = pneg %p165
      // Predicated region
      $region9: #{_propagation_layers.3} parent=5 // pred_check
        _
      $region10: #{_propagation_layers.3} parent=5 // pred_check_branch
        %168 = sbr.rel (%p165) target = $region12
      $region11: #{_propagation_layers.3} parent=5 // pred_region
        %s169 = ssub.s32 %s11, 1
      $region12: #{_propagation_layers.3} parent=5 // pred_fallthru
        _
      %p170 = scmp.lt.s32.totalorder %s11, 4
      // Predicated region
      $region13: #{_propagation_layers.3} parent=5 // pred_check
        %p171 = pneg %p170
      $region14: #{_propagation_layers.3} parent=5 // pred_check_branch
        %173 = sbr.rel (%p171) target = $region16
      $region15: #{_propagation_layers.3} parent=5 // pred_region
        // Predicated region
        $region17: #{_propagation_layers.3} parent=15 // pred_check
          %p174 = pneg %p45
        $region18: #{_propagation_layers.3} parent=15 // pred_check_branch
          %176 = sbr.rel (%p174) target = $region20
        $region19: #{_propagation_layers.3} parent=15 // pred_region
          %s177 = sand.u32 %s35, 1
          %s178 = sand.u32 %s35, 1
          %s179 = smul.addr %s178, 64
          %s180 = scalar_lea.vmem [#allocation3], %s179
          %s181 = smul.u32 16, %s18
          %s182 = smul.addr %s181, 2
          %s183 = sadd.s32 %s19, %s182
          %s184 = smul.addr %s183, 4
          %s185 = scalar_lea.vmem %s0, %s184
          // Predicated region
          $region21: #{_propagation_layers.3} parent=19 // pred_check
            _
          $region22: #{_propagation_layers.3} parent=19 // pred_check_branch
            %187 = sbr.rel (0) target = $region24
          $region23: #{_propagation_layers.3} parent=19 // pred_region
            // Predicated region
            $region25: #{_propagation_layers.3} parent=23 // pred_check
              _
            $region26: #{_propagation_layers.3} parent=23 // pred_check_branch
              %189 = sbr.rel target = $region28
            $region27: #{_propagation_layers.3} parent=23 // pred_region
              // Predicated region
              $region40: #{_propagation_layers.3} parent=27 // pred_check
                _
              $region41: #{_propagation_layers.3} parent=27 // pred_check_branch
                %234 = sbr.rel (0) target = $region43
              $region42: #{_propagation_layers.3} parent=27 // pred_region
                loop: start=0, step=1, limit=1
                $region44: #{_propagation_layers.3} parent=42 // loop_pre_header
                  _
                $region45: #{_propagation_layers.3} parent=42 // loop_header
                  %s236 = sphi 0, %s240
                  %p237 = scmp.ge.s32.totalorder %s236, 1
                  %s241 = sphi %s185, %s185
                  %s242 = sphi %s180, %s180
                $region46: #{_propagation_layers.3} parent=42 // loop_header_branch
                  %239 = sbr.rel (%p237) target = $region50
                $region47: #{_propagation_layers.3} parent=42 // loop_body
                  _
                $region48: #{_propagation_layers.3} parent=42 // loop_footer
                  %s240 = sadd.s32 1, %s236
                $region49: #{_propagation_layers.3} parent=42 // loop_footer_branch
                  %235 = sbr.rel target = $region45
                $region50: #{_propagation_layers.3} parent=42 // loop_exit
                  _
                loop: start=0, step=1, limit=1
                $region51: #{_propagation_layers.3} parent=42 // loop_pre_header
                  _
                $region52: #{_propagation_layers.3} parent=42 // loop_header
                  %s245 = sphi 0, %s249
                  %p246 = scmp.ge.s32.totalorder %s245, 1
                  %s250 = sphi %s185, %s185
                  %s251 = sphi %s180, %s180
                $region53: #{_propagation_layers.3} parent=42 // loop_header_branch
                  %248 = sbr.rel (%p246) target = $region57
                $region54: #{_propagation_layers.3} parent=42 // loop_body
                  %v252 = vld [vmem:[%s250] sm:$0xf]
                  %253 = vst [vmem:[%s251] sm:$0xf] %v252
                  %v254 = vld [vmem:[%s250 + $0x8] sm:$0xf]
                  %255 = vst [vmem:[%s251 + $0x4] sm:$0xf] %v254
                  %v256 = vld [vmem:[%s250 + $0x10] sm:$0xf]
                  %257 = vst [vmem:[%s251 + $0x8] sm:$0xf] %v256
                  %v258 = vld [vmem:[%s250 + $0x18] sm:$0xf]
                  %259 = vst [vmem:[%s251 + $0xc] sm:$0xf] %v258
                  %v260 = vld [vmem:[%s250 + $0x20] sm:$0xf]
                  %261 = vst [vmem:[%s251 + $0x10] sm:$0xf] %v260
                  %v262 = vld [vmem:[%s250 + $0x28] sm:$0xf]
                  %263 = vst [vmem:[%s251 + $0x14] sm:$0xf] %v262
                  %v264 = vld [vmem:[%s250 + $0x30] sm:$0xf]
                  %265 = vst [vmem:[%s251 + $0x18] sm:$0xf] %v264
                  %v266 = vld [vmem:[%s250 + $0x38] sm:$0xf]
                  %267 = vst [vmem:[%s251 + $0x1c] sm:$0xf] %v266
                  %v268 = vld [vmem:[%s250 + $0x40] sm:$0xf]
                  %269 = vst [vmem:[%s251 + $0x20] sm:$0xf] %v268
                  %v270 = vld [vmem:[%s250 + $0x48] sm:$0xf]
                  %271 = vst [vmem:[%s251 + $0x24] sm:$0xf] %v270
                  %v272 = vld [vmem:[%s250 + $0x50] sm:$0xf]
                  %273 = vst [vmem:[%s251 + $0x28] sm:$0xf] %v272
                  %v274 = vld [vmem:[%s250 + $0x58] sm:$0xf]
                  %275 = vst [vmem:[%s251 + $0x2c] sm:$0xf] %v274
                  %v276 = vld [vmem:[%s250 + $0x60] sm:$0xf]
                  %277 = vst [vmem:[%s251 + $0x30] sm:$0xf] %v276
                  %v278 = vld [vmem:[%s250 + $0x68] sm:$0xf]
                  %279 = vst [vmem:[%s251 + $0x34] sm:$0xf] %v278
                  %v280 = vld [vmem:[%s250 + $0x70] sm:$0xf]
                  %281 = vst [vmem:[%s251 + $0x38] sm:$0xf] %v280
                  %v282 = vld [vmem:[%s250 + $0x78] sm:$0xf]
                  %283 = vst [vmem:[%s251 + $0x3c] sm:$0xf] %v282
                $region55: #{_propagation_layers.3} parent=42 // loop_footer
                  %s249 = sadd.s32 1, %s245
                $region56: #{_propagation_layers.3} parent=42 // loop_footer_branch
                  %244 = sbr.rel target = $region52
                $region57: #{_propagation_layers.3} parent=42 // loop_exit
                  _
              $region43: #{_propagation_layers.3} parent=27 // pred_fallthru
                _
            $region28: #{_propagation_layers.3} parent=23 // pred_fallthru
              _
            // Predicated region
            $region29: #{_propagation_layers.3} parent=23 // pred_check
              _
            $region30: #{_propagation_layers.3} parent=23 // pred_check_branch
              %191 = sbr.rel (0) target = $region32
            $region31: #{_propagation_layers.3} parent=23 // pred_region
              loop: start=0, step=1, limit=1
              $region33: #{_propagation_layers.3} parent=31 // loop_pre_header
                _
              $region34: #{_propagation_layers.3} parent=31 // loop_header
                %s194 = sphi 0, %s198
                %p195 = scmp.ge.s32.totalorder %s194, 1
                %s199 = sphi %s185, %s185
                %s200 = sphi %s180, %s180
              $region35: #{_propagation_layers.3} parent=31 // loop_header_branch
                %197 = sbr.rel (%p195) target = $region39
              $region36: #{_propagation_layers.3} parent=31 // loop_body
                %v201 = vld [vmem:[%s199] sm:$0xf]
                %202 = vst [vmem:[%s200] sm:$0xf] %v201
                %v203 = vld [vmem:[%s199 + $0x8] sm:$0xf]
                %204 = vst [vmem:[%s200 + $0x4] sm:$0xf] %v203
                %v205 = vld [vmem:[%s199 + $0x10] sm:$0xf]
                %206 = vst [vmem:[%s200 + $0x8] sm:$0xf] %v205
                %v207 = vld [vmem:[%s199 + $0x18] sm:$0xf]
                %208 = vst [vmem:[%s200 + $0xc] sm:$0xf] %v207
                %v209 = vld [vmem:[%s199 + $0x20] sm:$0xf]
                %210 = vst [vmem:[%s200 + $0x10] sm:$0xf] %v209
                %v211 = vld [vmem:[%s199 + $0x28] sm:$0xf]
                %212 = vst [vmem:[%s200 + $0x14] sm:$0xf] %v211
                %v213 = vld [vmem:[%s199 + $0x30] sm:$0xf]
                %214 = vst [vmem:[%s200 + $0x18] sm:$0xf] %v213
                %v215 = vld [vmem:[%s199 + $0x38] sm:$0xf]
                %216 = vst [vmem:[%s200 + $0x1c] sm:$0xf] %v215
                %v217 = vld [vmem:[%s199 + $0x40] sm:$0xf]
                %218 = vst [vmem:[%s200 + $0x20] sm:$0xf] %v217
                %v219 = vld [vmem:[%s199 + $0x48] sm:$0xf]
                %220 = vst [vmem:[%s200 + $0x24] sm:$0xf] %v219
                %v221 = vld [vmem:[%s199 + $0x50] sm:$0xf]
                %222 = vst [vmem:[%s200 + $0x28] sm:$0xf] %v221
                %v223 = vld [vmem:[%s199 + $0x58] sm:$0xf]
                %224 = vst [vmem:[%s200 + $0x2c] sm:$0xf] %v223
                %v225 = vld [vmem:[%s199 + $0x60] sm:$0xf]
                %226 = vst [vmem:[%s200 + $0x30] sm:$0xf] %v225
                %v227 = vld [vmem:[%s199 + $0x68] sm:$0xf]
                %228 = vst [vmem:[%s200 + $0x34] sm:$0xf] %v227
                %v229 = vld [vmem:[%s199 + $0x70] sm:$0xf]
                %230 = vst [vmem:[%s200 + $0x38] sm:$0xf] %v229
                %v231 = vld [vmem:[%s199 + $0x78] sm:$0xf]
                %232 = vst [vmem:[%s200 + $0x3c] sm:$0xf] %v231
              $region37: #{_propagation_layers.3} parent=31 // loop_footer
                %s198 = sadd.s32 1, %s194
              $region38: #{_propagation_layers.3} parent=31 // loop_footer_branch
                %193 = sbr.rel target = $region34
              $region39: #{_propagation_layers.3} parent=31 // loop_exit
                _
            $region32: #{_propagation_layers.3} parent=23 // pred_fallthru
              _
          $region24: #{_propagation_layers.3} parent=19 // pred_fallthru
            _
          %284 = vnop
        $region20: #{_propagation_layers.3} parent=15 // pred_fallthru
          _
        // Predicated region
        $region58: #{_propagation_layers.3} parent=15 // pred_check
          %p285 = pneg %p71
        $region59: #{_propagation_layers.3} parent=15 // pred_check_branch
          %287 = sbr.rel (%p285) target = $region61
        $region60: #{_propagation_layers.3} parent=15 // pred_region
          %s288 = smul.u32 16, %s19
          %p289 = scmp.lt.s32.totalorder %s288, 31
          %s290 = scalar_select %p289, %s288, 31
          %s291 = smul.addr %s290, 4
          %s292 = scalar_lea.vmem %s1, %s291
          %s293 = smul.u32 16, %s19
        $region61: #{_propagation_layers.3} parent=15 // pred_fallthru
          _
        // Predicated region
        $region62: #{_propagation_layers.3} parent=15 // pred_check
          %p294 = pneg %p97
        $region63: #{_propagation_layers.3} parent=15 // pred_check_branch
          %296 = sbr.rel (%p294) target = $region65
        $region64: #{_propagation_layers.3} parent=15 // pred_region
          %s297 = smul.u32 16, %s18
          %p298 = scmp.lt.s32.totalorder %s297, 31
          %s299 = scalar_select %p298, %s297, 31
          %s300 = smul.addr %s299, 8
          %s301 = scalar_lea.vmem %s2, %s300
          %s302 = smul.u32 16, %s18
        $region65: #{_propagation_layers.3} parent=15 // pred_fallthru
          _
      $region16: #{_propagation_layers.3} parent=5 // pred_fallthru
        _
      %p303 = scmp.le.s32.totalorder 1, %s11
      %p304 = scmp.lt.s32.totalorder %s11, 5
      %p305 = pnand %p303, %p304
      %p306 = pneg %p305
      // Predicated region
      $region66: #{_propagation_layers.3} parent=5 // pred_check
        _
      $region67: #{_propagation_layers.3} parent=5 // pred_check_branch
        %308 = sbr.rel (%p305) target = $region69
      $region68: #{_propagation_layers.3} parent=5 // pred_region
        %s309 = ssub.s32 %s11, 1
        %s310 = sand.u32 %s38, 1
        %s311 = sand.u32 %s38, 1
        %s312 = smul.addr %s311, 64
        %s313 = scalar_lea.vmem [#allocation3], %s312
        // Predicated region
        $region70: #{_propagation_layers.3} parent=68 // pred_check
          %p314 = pneg %p51
        $region71: #{_propagation_layers.3} parent=68 // pred_check_branch
          %316 = sbr.rel (%p314) target = $region73
        $region72: #{_propagation_layers.3} parent=68 // pred_region
          _
        $region73: #{_propagation_layers.3} parent=68 // pred_fallthru
          _
        %s317 = sand.u32 %s38, 1
        %s318 = sand.u32 %s38, 1
        %s319 = smul.addr %s318, 64
        %s320 = scalar_lea.vmem [#allocation3], %s319
        %p321 = pneg %p51
        %p322 = pneg %p48
        %s323 = smul.u32 16, %s21
        %p324 = scmp.lt.s32.totalorder %s323, 31
        %s325 = scalar_select %p324, %s323, 31
        %s326 = smul.addr %s325, 4
        %s327 = scalar_lea.vmem %s1, %s326
        %p328 = pneg %p77
        %p329 = pneg %p74
        %s330 = smul.u32 16, %s20
        %p331 = scmp.lt.s32.totalorder %s330, 31
        %s332 = scalar_select %p331, %s330, 31
        %s333 = smul.addr %s332, 8
        %s334 = scalar_lea.vmem %s2, %s333
        %p335 = pneg %p103
        %p336 = pneg %p100
        %p337 = pneg %p129
        %p338 = pneg %p126
        %s339 = smul.u32 16, %s20
        %p340 = scmp.lt.s32.totalorder %s339, 31
        %s341 = scalar_select %p340, %s339, 31
        %s342 = smul.addr %s341, 4
        %s343 = scalar_lea.vmem %s3, %s342
        %p344 = pneg %p155
        %p345 = pneg %p152
        %s346 = smul.u32 16, %s20
        %p347 = scmp.lt.s32.totalorder %s346, 31
        %s348 = scalar_select %p347, %s346, 31
        %s349 = smul.addr %s348, 8
        %s350 = scalar_lea.vmem %s4, %s349
        %s351 = smul.u32 16, %s20
        %s352 = smul.u32 16, %s21
        %p353 = scmp.lt.s32.totalorder %s352, 31
        %s354 = scalar_select %p353, %s352, 31
        %s355 = smul.addr %s354, 4
        %s356 = scalar_lea.vmem %s1, %s355
        %s357 = smul.u32 16, %s21
        %s358 = smul.u32 16, %s20
        %p359 = scmp.lt.s32.totalorder %s358, 31
        %s360 = scalar_select %p359, %s358, 31
        %s361 = smul.addr %s360, 8
        %s362 = scalar_lea.vmem %s2, %s361
        %s363 = smul.u32 16, %s20
        %s364 = smul.u32 16, %s20
        %p365 = scmp.lt.s32.totalorder %s364, 31
        %s366 = scalar_select %p365, %s364, 31
        %s367 = smul.addr %s366, 4
        %s368 = scalar_lea.vmem %s3, %s367
        %s369 = smul.u32 16, %s20
        %s370 = smul.u32 16, %s20
        %p371 = scmp.lt.s32.totalorder %s370, 31
        %s372 = scalar_select %p371, %s370, 31
        %s373 = smul.addr %s372, 8
        %s374 = scalar_lea.vmem %s4, %s373
        %s375 = smul.u32 16, %s20
        %p377 = scmp.eq.s32.totalorder %s21, 0
        // Predicated region
        $region74: #{_propagation_layers.3} parent=68 // pred_check
          %p378 = pneg %p377
        $region75: #{_propagation_layers.3} parent=68 // pred_check_branch
          %380 = sbr.rel (%p378) target = $region77
        $region76: #{_propagation_layers.3} parent=68 // pred_region
          %381 = vst [vmem:[#allocation2] sm:$0xff] 0.0
          %382 = vst [vmem:[#allocation2 + $0x8] sm:$0xff] 0.0
          %383 = vst [vmem:[#allocation2 + $0x10] sm:$0xff] 0.0
          %384 = vst [vmem:[#allocation2 + $0x18] sm:$0xff] 0.0
          %385 = vst [vmem:[#allocation2 + $0x20] sm:$0xff] 0.0
          %386 = vst [vmem:[#allocation2 + $0x28] sm:$0xff] 0.0
          %387 = vst [vmem:[#allocation2 + $0x30] sm:$0xff] 0.0
          %388 = vst [vmem:[#allocation2 + $0x38] sm:$0xff] 0.0
          %389 = vst [vmem:[#allocation2 + $0x40] sm:$0xff] 0.0
          %390 = vst [vmem:[#allocation2 + $0x48] sm:$0xff] 0.0
          %391 = vst [vmem:[#allocation2 + $0x50] sm:$0xff] 0.0
          %392 = vst [vmem:[#allocation2 + $0x58] sm:$0xff] 0.0
          %393 = vst [vmem:[#allocation2 + $0x60] sm:$0xff] 0.0
          %394 = vst [vmem:[#allocation2 + $0x68] sm:$0xff] 0.0
          %395 = vst [vmem:[#allocation2 + $0x70] sm:$0xff] 0.0
          %396 = vst [vmem:[#allocation2 + $0x78] sm:$0xff] 0.0
        $region77: #{_propagation_layers.3} parent=68 // pred_fallthru
          _
        %v397 = vld [vmem:[#allocation2] sm:$0xff]
        %v398 = vld [vmem:[#allocation2 + $0x8] sm:$0xff]
        %v399 = vld [vmem:[#allocation2 + $0x10] sm:$0xff]
        %v400 = vld [vmem:[#allocation2 + $0x18] sm:$0xff]
        %v401 = vld [vmem:[#allocation2 + $0x20] sm:$0xff]
        %v402 = vld [vmem:[#allocation2 + $0x28] sm:$0xff]
        %v403 = vld [vmem:[#allocation2 + $0x30] sm:$0xff]
        %v404 = vld [vmem:[#allocation2 + $0x38] sm:$0xff]
        %v405 = vld [vmem:[#allocation2 + $0x40] sm:$0xff]
        %v406 = vld [vmem:[#allocation2 + $0x48] sm:$0xff]
        %v407 = vld [vmem:[#allocation2 + $0x50] sm:$0xff]
        %v408 = vld [vmem:[#allocation2 + $0x58] sm:$0xff]
        %v409 = vld [vmem:[#allocation2 + $0x60] sm:$0xff]
        %v410 = vld [vmem:[#allocation2 + $0x68] sm:$0xff]
        %v411 = vld [vmem:[#allocation2 + $0x70] sm:$0xff]
        %v412 = vld [vmem:[#allocation2 + $0x78] sm:$0xff]
        %v413 = vld [vmem:[%s313] sm:$0xf]
        %v414 = vld [vmem:[%s313 + $0x4] sm:$0xf]
        %v415 = vld [vmem:[%s313 + $0x8] sm:$0xf]
        %v416 = vld [vmem:[%s313 + $0xc] sm:$0xf]
        %v417 = vld [vmem:[%s313 + $0x10] sm:$0xf]
        %v418 = vld [vmem:[%s313 + $0x14] sm:$0xf]
        %v419 = vld [vmem:[%s313 + $0x18] sm:$0xf]
        %v420 = vld [vmem:[%s313 + $0x1c] sm:$0xf]
        %v421 = vld [vmem:[%s313 + $0x20] sm:$0xf]
        %v422 = vld [vmem:[%s313 + $0x24] sm:$0xf]
        %v423 = vld [vmem:[%s313 + $0x28] sm:$0xf]
        %v424 = vld [vmem:[%s313 + $0x2c] sm:$0xf]
        %v425 = vld [vmem:[%s313 + $0x30] sm:$0xf]
        %v426 = vld [vmem:[%s313 + $0x34] sm:$0xf]
        %v427 = vld [vmem:[%s313 + $0x38] sm:$0xf]
        %v428 = vld [vmem:[%s313 + $0x3c] sm:$0xf]
        %v429 = vld [vmem:[%s356] sm:$0xf]
        %v430 = vld [vmem:[%s356 + $0x4] sm:$0xf]
        %v431 = vld [vmem:[%s356 + $0x8] sm:$0xf]
        %v432 = vld [vmem:[%s356 + $0xc] sm:$0xf]
        %v433 = vld [vmem:[%s356 + $0x10] sm:$0xf]
        %v434 = vld [vmem:[%s356 + $0x14] sm:$0xf]
        %v435 = vld [vmem:[%s356 + $0x18] sm:$0xf]
        %v436 = vld [vmem:[%s356 + $0x1c] sm:$0xf]
        %v437 = vld [vmem:[%s356 + $0x20] sm:$0xf]
        %v438 = vld [vmem:[%s356 + $0x24] sm:$0xf]
        %v439 = vld [vmem:[%s356 + $0x28] sm:$0xf]
        %v440 = vld [vmem:[%s356 + $0x2c] sm:$0xf]
        %v441 = vld [vmem:[%s356 + $0x30] sm:$0xf]
        %v442 = vld [vmem:[%s356 + $0x34] sm:$0xf]
        %v443 = vld [vmem:[%s356 + $0x38] sm:$0xf]
        %v444 = vld [vmem:[%s356 + $0x3c] sm:$0xf]
        %v461 = vunpack.c.l.b16 %v413
        %v462 = vunpack.c.l.b16 %v414
        %v463 = vunpack.c.l.b16 %v415
        %v464 = vunpack.c.l.b16 %v416
        %v465 = vunpack.c.l.b16 %v417
        %v466 = vunpack.c.l.b16 %v418
        %v467 = vunpack.c.l.b16 %v419
        %v468 = vunpack.c.l.b16 %v420
        %v469 = vunpack.c.l.b16 %v421
        %v470 = vunpack.c.l.b16 %v422
        %v471 = vunpack.c.l.b16 %v423
        %v472 = vunpack.c.l.b16 %v424
        %v473 = vunpack.c.l.b16 %v425
        %v474 = vunpack.c.l.b16 %v426
        %v475 = vunpack.c.l.b16 %v427
        %v476 = vunpack.c.l.b16 %v428
        %v477 = vpack.c.b16 %v462, %v461
        %v478 = vpack.c.b16 %v464, %v463
        %v479 = vpack.c.b16 %v466, %v465
        %v480 = vpack.c.b16 %v468, %v467
        %v481 = vpack.c.b16 %v470, %v469
        %v482 = vpack.c.b16 %v472, %v471
        %v483 = vpack.c.b16 %v474, %v473
        %v484 = vpack.c.b16 %v476, %v475
        %v509 = vunpack.c.l.b16 %v429
        %v510 = vunpack.c.l.b16 %v430
        %v511 = vunpack.c.l.b16 %v431
        %v512 = vunpack.c.l.b16 %v432
        %v513 = vunpack.c.l.b16 %v433
        %v514 = vunpack.c.l.b16 %v434
        %v515 = vunpack.c.l.b16 %v435
        %v516 = vunpack.c.l.b16 %v436
        %v517 = vunpack.c.l.b16 %v437
        %v518 = vunpack.c.l.b16 %v438
        %v519 = vunpack.c.l.b16 %v439
        %v520 = vunpack.c.l.b16 %v440
        %v521 = vunpack.c.l.b16 %v441
        %v522 = vunpack.c.l.b16 %v442
        %v523 = vunpack.c.l.b16 %v443
        %v524 = vunpack.c.l.b16 %v444
        %v525 = vpack.c.b16 %v510, %v509
        %v526 = vpack.c.b16 %v512, %v511
        %v527 = vpack.c.b16 %v514, %v513
        %v528 = vpack.c.b16 %v516, %v515
        %v529 = vpack.c.b16 %v518, %v517
        %v530 = vpack.c.b16 %v520, %v519
        %v531 = vpack.c.b16 %v522, %v521
        %v532 = vpack.c.b16 %v524, %v523
        %541 = vmatprep.subr.bf16.mxu0 0
        %542 = vmatpush1.bf16.msra.mxu0 %v525
        %543 = vmatprep.subr.bf16.mxu0 0
        %544 = vmatpush1.bf16.msra.mxu0 %v526
        %545 = vmatprep.subr.bf16.mxu0 0
        %546 = vmatpush1.bf16.msra.mxu0 %v527
        %547 = vmatprep.subr.bf16.mxu0 0
        %548 = vmatpush1.bf16.msra.mxu0 %v528
        %549 = vmatprep.subr.bf16.mxu0 0
        %550 = vmatpush1.bf16.msra.mxu0 %v529
        %551 = vmatprep.subr.bf16.mxu0 0
        %552 = vmatpush1.bf16.msra.mxu0 %v530
        %553 = vmatprep.subr.bf16.mxu0 0
        %554 = vmatpush1.bf16.msra.mxu0 %v531
        %555 = vmatprep.subr.bf16.mxu0 0
        %556 = vmatpush1.bf16.msra.mxu0 %v532
        %557 = vmatprep.subr.bf16.mxu0 0
        %558 = vmatpush1.bf16.msra.mxu0 0
        %559 = vmatprep.subr.bf16.mxu0 0
        %560 = vmatpush1.bf16.msra.mxu0 0
        %561 = vmatprep.subr.bf16.mxu0 0
        %562 = vmatpush1.bf16.msra.mxu0 0
        %563 = vmatprep.subr.bf16.mxu0 0
        %564 = vmatpush1.bf16.msra.mxu0 0
        %565 = vmatprep.subr.bf16.mxu0 0
        %566 = vmatpush1.bf16.msra.mxu0 0
        %567 = vmatprep.subr.bf16.mxu0 0
        %568 = vmatpush1.bf16.msra.mxu0 0
        %569 = vmatprep.subr.bf16.mxu0 0
        %570 = vmatpush1.bf16.msra.mxu0 0
        %571 = vmatprep.subr.bf16.mxu0 0
        %572 = vmatpush1.bf16.msra.mxu0 0
        %573 = vmatprep.mubr.bf16.mxu0 0
        %574 = vmatmul.mubr.bf16.gmra.mrb[0].mxu0 %v477
        %v575 = vpop.f32.mrb[0].mxu0
        %v576 = vadd.f32 0.0, %v575
        %v577 = vpop.f32.mrb[0].mxu0
        %v578 = vpop.f32.mrb[0].mxu0
        %v579 = vadd.f32 0.0, %v578
        %v580 = vpop.f32.mrb[0].mxu0
        %581 = vmatprep.mubr.bf16.mxu0 0
        %582 = vmatmul.mubr.bf16.gmra.mrb[0].mxu0 %v478
        %v583 = vpop.f32.mrb[0].mxu0
        %v584 = vadd.f32 0.0, %v583
        %v585 = vpop.f32.mrb[0].mxu0
        %v586 = vpop.f32.mrb[0].mxu0
        %v587 = vadd.f32 0.0, %v586
        %v588 = vpop.f32.mrb[0].mxu0
        %589 = vmatprep.mubr.bf16.mxu0 0
        %590 = vmatmul.mubr.bf16.gmra.mrb[0].mxu0 %v479
        %v591 = vpop.f32.mrb[0].mxu0
        %v592 = vadd.f32 0.0, %v591
        %v593 = vpop.f32.mrb[0].mxu0
        %v594 = vpop.f32.mrb[0].mxu0
        %v595 = vadd.f32 0.0, %v594
        %v596 = vpop.f32.mrb[0].mxu0
        %597 = vmatprep.mubr.bf16.mxu0 0
        %598 = vmatmul.mubr.bf16.gmra.mrb[0].mxu0 %v480
        %v599 = vpop.f32.mrb[0].mxu0
        %v600 = vadd.f32 0.0, %v599
        %v601 = vpop.f32.mrb[0].mxu0
        %v602 = vpop.f32.mrb[0].mxu0
        %v603 = vadd.f32 0.0, %v602
        %v604 = vpop.f32.mrb[0].mxu0
        %605 = vmatprep.mubr.bf16.mxu0 0
        %606 = vmatmul.mubr.bf16.gmra.mrb[0].mxu0 %v481
        %v607 = vpop.f32.mrb[0].mxu0
        %v608 = vadd.f32 0.0, %v607
        %v609 = vpop.f32.mrb[0].mxu0
        %v610 = vpop.f32.mrb[0].mxu0
        %v611 = vadd.f32 0.0, %v610
        %v612 = vpop.f32.mrb[0].mxu0
        %613 = vmatprep.mubr.bf16.mxu0 0
        %614 = vmatmul.mubr.bf16.gmra.mrb[0].mxu0 %v482
        %v615 = vpop.f32.mrb[0].mxu0
        %v616 = vadd.f32 0.0, %v615
        %v617 = vpop.f32.mrb[0].mxu0
        %v618 = vpop.f32.mrb[0].mxu0
        %v619 = vadd.f32 0.0, %v618
        %v620 = vpop.f32.mrb[0].mxu0
        %621 = vmatprep.mubr.bf16.mxu0 0
        %622 = vmatmul.mubr.bf16.gmra.mrb[0].mxu0 %v483
        %v623 = vpop.f32.mrb[0].mxu0
        %v624 = vadd.f32 0.0, %v623
        %v625 = vpop.f32.mrb[0].mxu0
        %v626 = vpop.f32.mrb[0].mxu0
        %v627 = vadd.f32 0.0, %v626
        %v628 = vpop.f32.mrb[0].mxu0
        %629 = vmatprep.mubr.bf16.mxu0 0
        %630 = vmatmul.mubr.bf16.gmra.mrb[0].mxu0 %v484
        %v631 = vpop.f32.mrb[0].mxu0
        %v632 = vadd.f32 0.0, %v631
        %v633 = vpop.f32.mrb[0].mxu0
        %v634 = vpop.f32.mrb[0].mxu0
        %v635 = vadd.f32 0.0, %v634
        %v636 = vpop.f32.mrb[0].mxu0
        %637 = vdwg.mxu0
        %v638 = vadd.f32 %v397, %v576
        %v639 = vadd.f32 %v398, %v579
        %v640 = vadd.f32 %v399, %v584
        %v641 = vadd.f32 %v400, %v587
        %v642 = vadd.f32 %v401, %v592
        %v643 = vadd.f32 %v402, %v595
        %v644 = vadd.f32 %v403, %v600
        %v645 = vadd.f32 %v404, %v603
        %v646 = vadd.f32 %v405, %v608
        %v647 = vadd.f32 %v406, %v611
        %v648 = vadd.f32 %v407, %v616
        %v649 = vadd.f32 %v408, %v619
        %v650 = vadd.f32 %v409, %v624
        %v651 = vadd.f32 %v410, %v627
        %v652 = vadd.f32 %v411, %v632
        %v653 = vadd.f32 %v412, %v635
        %654 = vst [vmem:[#allocation2] sm:$0xff] %v638
        %655 = vst [vmem:[#allocation2 + $0x8] sm:$0xff] %v639
        %656 = vst [vmem:[#allocation2 + $0x10] sm:$0xff] %v640
        %657 = vst [vmem:[#allocation2 + $0x18] sm:$0xff] %v641
        %658 = vst [vmem:[#allocation2 + $0x20] sm:$0xff] %v642
        %659 = vst [vmem:[#allocation2 + $0x28] sm:$0xff] %v643
        %660 = vst [vmem:[#allocation2 + $0x30] sm:$0xff] %v644
        %661 = vst [vmem:[#allocation2 + $0x38] sm:$0xff] %v645
        %662 = vst [vmem:[#allocation2 + $0x40] sm:$0xff] %v646
        %663 = vst [vmem:[#allocation2 + $0x48] sm:$0xff] %v647
        %664 = vst [vmem:[#allocation2 + $0x50] sm:$0xff] %v648
        %665 = vst [vmem:[#allocation2 + $0x58] sm:$0xff] %v649
        %666 = vst [vmem:[#allocation2 + $0x60] sm:$0xff] %v650
        %667 = vst [vmem:[#allocation2 + $0x68] sm:$0xff] %v651
        %668 = vst [vmem:[#allocation2 + $0x70] sm:$0xff] %v652
        %669 = vst [vmem:[#allocation2 + $0x78] sm:$0xff] %v653
        %p670 = scmp.eq.s32.totalorder %s21, 1
        // Predicated region
        $region78: #{_propagation_layers.3} parent=68 // pred_check
          %p671 = pneg %p670
        $region79: #{_propagation_layers.3} parent=68 // pred_check_branch
          %673 = sbr.rel (%p671) target = $region81
        $region80: #{_propagation_layers.3} parent=68 // pred_region
          %v674 = vld [vmem:[#allocation2] sm:$0xff]
          %v675 = vld [vmem:[#allocation2 + $0x8] sm:$0xff]
          %v676 = vld [vmem:[#allocation2 + $0x10] sm:$0xff]
          %v677 = vld [vmem:[#allocation2 + $0x18] sm:$0xff]
          %v678 = vld [vmem:[#allocation2 + $0x20] sm:$0xff]
          %v679 = vld [vmem:[#allocation2 + $0x28] sm:$0xff]
          %v680 = vld [vmem:[#allocation2 + $0x30] sm:$0xff]
          %v681 = vld [vmem:[#allocation2 + $0x38] sm:$0xff]
          %v682 = vld [vmem:[#allocation2 + $0x40] sm:$0xff]
          %v683 = vld [vmem:[#allocation2 + $0x48] sm:$0xff]
          %v684 = vld [vmem:[#allocation2 + $0x50] sm:$0xff]
          %v685 = vld [vmem:[#allocation2 + $0x58] sm:$0xff]
          %v686 = vld [vmem:[#allocation2 + $0x60] sm:$0xff]
          %v687 = vld [vmem:[#allocation2 + $0x68] sm:$0xff]
          %v688 = vld [vmem:[#allocation2 + $0x70] sm:$0xff]
          %v689 = vld [vmem:[#allocation2 + $0x78] sm:$0xff]
          %v690 = vpack.c.bf16 %v675, %v674
          %v691 = vpack.c.bf16 %v677, %v676
          %v692 = vpack.c.bf16 %v679, %v678
          %v693 = vpack.c.bf16 %v681, %v680
          %v694 = vpack.c.bf16 %v683, %v682
          %v695 = vpack.c.bf16 %v685, %v684
          %v696 = vpack.c.bf16 %v687, %v686
          %v697 = vpack.c.bf16 %v689, %v688
          %v706 = vunpack.c.l.b16 %v690
          %v707 = vunpack.c.h.b16 %v690
          %v708 = vunpack.c.l.b16 %v691
          %v709 = vunpack.c.h.b16 %v691
          %v710 = vunpack.c.l.b16 %v692
          %v711 = vunpack.c.h.b16 %v692
          %v712 = vunpack.c.l.b16 %v693
          %v713 = vunpack.c.h.b16 %v693
          %v714 = vunpack.c.l.b16 %v694
          %v715 = vunpack.c.h.b16 %v694
          %v716 = vunpack.c.l.b16 %v695
          %v717 = vunpack.c.h.b16 %v695
          %v718 = vunpack.c.l.b16 %v696
          %v719 = vunpack.c.h.b16 %v696
          %v720 = vunpack.c.l.b16 %v697
          %v721 = vunpack.c.h.b16 %v697
          %v722 = vpack.c.b16 %v706, %v706
          %v723 = vpack.c.b16 %v707, %v707
          %v724 = vpack.c.b16 %v708, %v708
          %v725 = vpack.c.b16 %v709, %v709
          %v726 = vpack.c.b16 %v710, %v710
          %v727 = vpack.c.b16 %v711, %v711
          %v728 = vpack.c.b16 %v712, %v712
          %v729 = vpack.c.b16 %v713, %v713
          %v730 = vpack.c.b16 %v714, %v714
          %v731 = vpack.c.b16 %v715, %v715
          %v732 = vpack.c.b16 %v716, %v716
          %v733 = vpack.c.b16 %v717, %v717
          %v734 = vpack.c.b16 %v718, %v718
          %v735 = vpack.c.b16 %v719, %v719
          %v736 = vpack.c.b16 %v720, %v720
          %v737 = vpack.c.b16 %v721, %v721
          %754 = vst [vmem:[%s368] sm:$0xf] %v722
          %755 = vst [vmem:[%s368 + $0x4] sm:$0xf] %v723
          %756 = vst [vmem:[%s368 + $0x8] sm:$0xf] %v724
          %757 = vst [vmem:[%s368 + $0xc] sm:$0xf] %v725
          %758 = vst [vmem:[%s368 + $0x10] sm:$0xf] %v726
          %759 = vst [vmem:[%s368 + $0x14] sm:$0xf] %v727
          %760 = vst [vmem:[%s368 + $0x18] sm:$0xf] %v728
          %761 = vst [vmem:[%s368 + $0x1c] sm:$0xf] %v729
          %762 = vst [vmem:[%s368 + $0x20] sm:$0xf] %v730
          %763 = vst [vmem:[%s368 + $0x24] sm:$0xf] %v731
          %764 = vst [vmem:[%s368 + $0x28] sm:$0xf] %v732
          %765 = vst [vmem:[%s368 + $0x2c] sm:$0xf] %v733
          %766 = vst [vmem:[%s368 + $0x30] sm:$0xf] %v734
          %767 = vst [vmem:[%s368 + $0x34] sm:$0xf] %v735
          %768 = vst [vmem:[%s368 + $0x38] sm:$0xf] %v736
          %769 = vst [vmem:[%s368 + $0x3c] sm:$0xf] %v737
          %v770 = vld [vmem:[%s362] sm:$0xff]
          %v771 = vld [vmem:[%s362 + $0x8] sm:$0xff]
          %v772 = vld [vmem:[%s362 + $0x10] sm:$0xff]
          %v773 = vld [vmem:[%s362 + $0x18] sm:$0xff]
          %v774 = vld [vmem:[%s362 + $0x20] sm:$0xff]
          %v775 = vld [vmem:[%s362 + $0x28] sm:$0xff]
          %v776 = vld [vmem:[%s362 + $0x30] sm:$0xff]
          %v777 = vld [vmem:[%s362 + $0x38] sm:$0xff]
          %v778 = vld [vmem:[%s362 + $0x40] sm:$0xff]
          %v779 = vld [vmem:[%s362 + $0x48] sm:$0xff]
          %v780 = vld [vmem:[%s362 + $0x50] sm:$0xff]
          %v781 = vld [vmem:[%s362 + $0x58] sm:$0xff]
          %v782 = vld [vmem:[%s362 + $0x60] sm:$0xff]
          %v783 = vld [vmem:[%s362 + $0x68] sm:$0xff]
          %v784 = vld [vmem:[%s362 + $0x70] sm:$0xff]
          %v785 = vld [vmem:[%s362 + $0x78] sm:$0xff]
          %v786 = vadd.f32 %v770, %v674
          %v787 = vadd.f32 %v771, %v675
          %v788 = vadd.f32 %v772, %v676
          %v789 = vadd.f32 %v773, %v677
          %v790 = vadd.f32 %v774, %v678
          %v791 = vadd.f32 %v775, %v679
          %v792 = vadd.f32 %v776, %v680
          %v793 = vadd.f32 %v777, %v681
          %v794 = vadd.f32 %v778, %v682
          %v795 = vadd.f32 %v779, %v683
          %v796 = vadd.f32 %v780, %v684
          %v797 = vadd.f32 %v781, %v685
          %v798 = vadd.f32 %v782, %v686
          %v799 = vadd.f32 %v783, %v687
          %v800 = vadd.f32 %v784, %v688
          %v801 = vadd.f32 %v785, %v689
          %802 = vst [vmem:[%s374] sm:$0xff] %v786
          %803 = vst [vmem:[%s374 + $0x8] sm:$0xff] %v787
          %804 = vst [vmem:[%s374 + $0x10] sm:$0xff] %v788
          %805 = vst [vmem:[%s374 + $0x18] sm:$0xff] %v789
          %806 = vst [vmem:[%s374 + $0x20] sm:$0xff] %v790
          %807 = vst [vmem:[%s374 + $0x28] sm:$0xff] %v791
          %808 = vst [vmem:[%s374 + $0x30] sm:$0xff] %v792
          %809 = vst [vmem:[%s374 + $0x38] sm:$0xff] %v793
          %810 = vst [vmem:[%s374 + $0x40] sm:$0xff] %v794
          %811 = vst [vmem:[%s374 + $0x48] sm:$0xff] %v795
          %812 = vst [vmem:[%s374 + $0x50] sm:$0xff] %v796
          %813 = vst [vmem:[%s374 + $0x58] sm:$0xff] %v797
          %814 = vst [vmem:[%s374 + $0x60] sm:$0xff] %v798
          %815 = vst [vmem:[%s374 + $0x68] sm:$0xff] %v799
          %816 = vst [vmem:[%s374 + $0x70] sm:$0xff] %v800
          %817 = vst [vmem:[%s374 + $0x78] sm:$0xff] %v801
        $region81: #{_propagation_layers.3} parent=68 // pred_fallthru
          _
        %s818 = smul.u32 16, %s20
        %p819 = scmp.lt.s32.totalorder %s818, 31
        %s820 = scalar_select %p819, %s818, 31
        %s821 = smul.addr %s820, 4
        %s822 = scalar_lea.vmem %s3, %s821
        %s823 = smul.u32 16, %s20
        %p824 = scmp.lt.s32.totalorder %s823, 31
        %s825 = scalar_select %p824, %s823, 31
        %s826 = smul.addr %s825, 8
        %s827 = scalar_lea.vmem %s4, %s826
        // Predicated region
        $region82: #{_propagation_layers.3} parent=68 // pred_check
          %p828 = pneg %p126
        $region83: #{_propagation_layers.3} parent=68 // pred_check_branch
          %830 = sbr.rel (%p828) target = $region85
        $region84: #{_propagation_layers.3} parent=68 // pred_region
          %s831 = smul.u32 16, %s20
        $region85: #{_propagation_layers.3} parent=68 // pred_fallthru
          _
        // Predicated region
        $region86: #{_propagation_layers.3} parent=68 // pred_check
          %p832 = pneg %p152
        $region87: #{_propagation_layers.3} parent=68 // pred_check_branch
          %834 = sbr.rel (%p832) target = $region89
        $region88: #{_propagation_layers.3} parent=68 // pred_region
          %s835 = smul.u32 16, %s20
        $region89: #{_propagation_layers.3} parent=68 // pred_fallthru
          _
      $region69: #{_propagation_layers.3} parent=5 // pred_fallthru
        _
      %p836 = scmp.le.s32.totalorder 2, %s11
      // Predicated region
      $region90: #{_propagation_layers.3} parent=5 // pred_check
        %p837 = pneg %p836
      $region91: #{_propagation_layers.3} parent=5 // pred_check_branch
        %839 = sbr.rel (%p837) target = $region93
      $region92: #{_propagation_layers.3} parent=5 // pred_region
        %s840 = ssub.s32 %s11, 2
        // Predicated region
        $region94: #{_propagation_layers.3} parent=92 // pred_check
          %p841 = pneg %p132
        $region95: #{_propagation_layers.3} parent=92 // pred_check_branch
          %843 = sbr.rel (%p841) target = $region97
        $region96: #{_propagation_layers.3} parent=92 // pred_region
          %s844 = smul.u32 16, %s22
          %p845 = scmp.lt.s32.totalorder %s844, 31
          %s846 = scalar_select %p845, %s844, 31
          %s847 = smul.addr %s846, 4
          %s848 = scalar_lea.vmem %s3, %s847
        $region97: #{_propagation_layers.3} parent=92 // pred_fallthru
          _
        // Predicated region
        $region98: #{_propagation_layers.3} parent=92 // pred_check
          %p849 = pneg %p158
        $region99: #{_propagation_layers.3} parent=92 // pred_check_branch
          %851 = sbr.rel (%p849) target = $region101
        $region100: #{_propagation_layers.3} parent=92 // pred_region
          %s852 = smul.u32 16, %s22
          %p853 = scmp.lt.s32.totalorder %s852, 31
          %s854 = scalar_select %p853, %s852, 31
          %s855 = smul.addr %s854, 8
          %s856 = scalar_lea.vmem %s4, %s855
        $region101: #{_propagation_layers.3} parent=92 // pred_fallthru
          _
      $region93: #{_propagation_layers.3} parent=5 // pred_fallthru
        _
    $region6: #{_propagation_layers.3} parent=1 // loop_footer
      %s15 = sadd.s32 1, %s11
    $region7: #{_propagation_layers.3} parent=1 // loop_footer_branch
      %10 = sbr.rel target = $region3
    $region8: #{_propagation_layers.3} parent=1 // loop_exit
      _

// kernel: _propagation_layers.5
$region0: #{_propagation_layers.5}
  #allocation0 [shape = 'u32[]', space=smem, size = 0x4, offset = 0x4, fixed_abs, tag = 'smem constant byte address 0x4 - core index']
  #allocation1 [shape = 'u32[144,128]{1,0:T(1,128)}', space=vmem, size = 0x12000, scoped, tag = 'internal scratch']
  #allocation2 [shape = 'f32[128,128]{1,0:T(8,128)}', space=vmem, size = 0x10000, scoped, tag = 'scratch operand']
  %s0 = inlined_call_operand.vmem [shape: bf16[256,256], index: 0, kind: input, shape index: {}]
  %s1 = inlined_call_operand.vmem [shape: bf16[256,128], index: 1, kind: input, shape index: {}]
  %s2 = inlined_call_operand.hbm [shape: f32[256,128], index: 2, kind: input, shape index: {}, may-alias: {2,3}]
  %s3 = inlined_call_operand.hbm [shape: f32[256,128], index: 3, kind: output, shape index: {}, may-alias: {2,3}]
  %s4 = sld [smem:[#allocation0]]
  $region98: #{_propagation_layers.5} parent=0
    _
  %s6 = ssub.s32 1, %s4
  %s7 = scalar_select 0, %s6, %s4
  $region1: #{_propagation_layers.5} parent=0
    #allocation3 [shape = 'u8[65536]{0}', space=vmem, size = 0x10000, scoped, tag = 'input window, operand 0']
    #allocation4 [shape = 'u8[131072]{0}', space=vmem, size = 0x20000, scoped, tag = 'input window, operand 2']
    #allocation5 [shape = 's32[2]{0}', space=sflag, size = 0x8, scoped, tag = 'scoped memory for _propagation_layers.5']
    #allocation6 [shape = 's32[2]{0}', space=sflag, size = 0x8, scoped, tag = 'scoped memory for _propagation_layers.5']
    #allocation7 [shape = 'u8[131072]{0}', space=vmem, size = 0x20000, scoped, tag = 'output window, operand 0']
    %8 = vsyncpa [#allocation5], 0
    %s9 = scalar_lea.sflag [#allocation5], 1
    %10 = vsyncpa %s9, 0
    %11 = vsyncpa [#allocation6], 0
    %s12 = scalar_lea.sflag [#allocation6], 1
    %13 = vsyncpa %s12, 0
    loop: start=0, step=1, limit=6
    $region2: #{_propagation_layers.5} parent=1 // loop_pre_header
      _
    $region3: #{_propagation_layers.5} parent=1 // loop_header
      %s15 = sphi 0, %s19
      %p16 = scmp.ge.s32.totalorder %s15, 6
      %s22 = sphi 0, %s34
      %s23 = sphi 0, %s30
      %s24 = sphi 0, %s22
      %s25 = sphi 0, %s23
      %s26 = sphi 0, %s24
      %s27 = sphi 0, %s25
      %s39 = sphi 0, %s41
      %s42 = sphi 0, %s39
      %s43 = sphi 0, %s42
      %s59 = sphi 0, %s43
      %s65 = sphi 0, %s67
      %s68 = sphi 0, %s65
      %s69 = sphi 0, %s68
      %s85 = sphi 0, %s69
      %s91 = sphi 0, %s93
      %s94 = sphi 0, %s91
      %s95 = sphi 0, %s94
      %s111 = sphi 0, %s95
      %s117 = sphi 0, %s119
      %s120 = sphi 0, %s117
      %s121 = sphi 0, %s120
      %s137 = sphi 0, %s121
    $region4: #{_propagation_layers.5} parent=1 // loop_header_branch
      %18 = sbr.rel (%p16) target = $region8
    $region5: #{_propagation_layers.5} parent=1 // loop_body
      %s20 = ssub.s32 %s15, 1
      %s21 = ssub.s32 %s15, 2
      %s28 = sadd.s32 1, %s23
      %p29 = scmp.ge.s32.totalorder %s28, 2
      %s30 = scalar_select %p29, 0, %s28
      %s31 = sadd.s32 1, %s22
      %s32 = scalar_select %p29, %s31, %s22
      %p33 = scmp.ge.s32.totalorder %s32, 2
      %s34 = scalar_select %p33, 0, %s32
      %s35 = ssub.s32 %s22, %s34
      %s36 = ssub.s32 %s23, %s30
      %s37 = sor.u32 %s35, %s36
      %p38 = scmp.eq.s32.totalorder %s37, 0
      %s40 = sadd.s32 %s39, 1
      %s41 = scalar_select %p38, %s39, %s40
      %p44 = pneg %p38
      %p45 = scmp.eq.s32.totalorder %s15, 3
      %p46 = por %p44, %p45
      %p47 = scmp.ne.s32.totalorder %s39, %s42
      %p48 = scmp.eq.s32.totalorder %s15, 0
      %p49 = por %p47, %p48
      %p50 = scmp.ne.s32.totalorder %s39, %s42
      %p51 = scmp.eq.s32.totalorder %s20, 3
      %p52 = por %p50, %p51
      %p53 = scmp.ne.s32.totalorder %s42, %s43
      %p54 = scmp.eq.s32.totalorder %s20, 0
      %p55 = por %p53, %p54
      %p56 = scmp.ne.s32.totalorder %s42, %s43
      %p57 = scmp.eq.s32.totalorder %s21, 3
      %p58 = por %p56, %p57
      %p60 = scmp.ne.s32.totalorder %s43, %s59
      %p61 = scmp.eq.s32.totalorder %s21, 0
      %p62 = por %p60, %p61
      %s63 = ssub.s32 %s23, %s30
      %p64 = scmp.eq.s32.totalorder %s63, 0
      %s66 = sadd.s32 %s65, 1
      %s67 = scalar_select %p64, %s65, %s66
      %p70 = pneg %p64
      %p71 = scmp.eq.s32.totalorder %s15, 3
      %p72 = por %p70, %p71
      %p73 = scmp.ne.s32.totalorder %s65, %s68
      %p74 = scmp.eq.s32.totalorder %s15, 0
      %p75 = por %p73, %p74
      %p76 = scmp.ne.s32.totalorder %s65, %s68
      %p77 = scmp.eq.s32.totalorder %s20, 3
      %p78 = por %p76, %p77
      %p79 = scmp.ne.s32.totalorder %s68, %s69
      %p80 = scmp.eq.s32.totalorder %s20, 0
      %p81 = por %p79, %p80
      %p82 = scmp.ne.s32.totalorder %s68, %s69
      %p83 = scmp.eq.s32.totalorder %s21, 3
      %p84 = por %p82, %p83
      %p86 = scmp.ne.s32.totalorder %s69, %s85
      %p87 = scmp.eq.s32.totalorder %s21, 0
      %p88 = por %p86, %p87
      %s89 = ssub.s32 %s22, %s34
      %p90 = scmp.eq.s32.totalorder %s89, 0
      %s92 = sadd.s32 %s91, 1
      %s93 = scalar_select %p90, %s91, %s92
      %p96 = pneg %p90
      %p97 = scmp.eq.s32.totalorder %s15, 3
      %p98 = por %p96, %p97
      %p99 = scmp.ne.s32.totalorder %s91, %s94
      %p100 = scmp.eq.s32.totalorder %s15, 0
      %p101 = por %p99, %p100
      %p102 = scmp.ne.s32.totalorder %s91, %s94
      %p103 = scmp.eq.s32.totalorder %s20, 3
      %p104 = por %p102, %p103
      %p105 = scmp.ne.s32.totalorder %s94, %s95
      %p106 = scmp.eq.s32.totalorder %s20, 0
      %p107 = por %p105, %p106
      %p108 = scmp.ne.s32.totalorder %s94, %s95
      %p109 = scmp.eq.s32.totalorder %s21, 3
      %p110 = por %p108, %p109
      %p112 = scmp.ne.s32.totalorder %s95, %s111
      %p113 = scmp.eq.s32.totalorder %s21, 0
      %p114 = por %p112, %p113
      %s115 = ssub.s32 %s22, %s34
      %p116 = scmp.eq.s32.totalorder %s115, 0
      %s118 = sadd.s32 %s117, 1
      %s119 = scalar_select %p116, %s117, %s118
      %p122 = pneg %p116
      %p123 = scmp.eq.s32.totalorder %s15, 3
      %p124 = por %p122, %p123
      %p125 = scmp.ne.s32.totalorder %s117, %s120
      %p126 = scmp.eq.s32.totalorder %s15, 0
      %p127 = por %p125, %p126
      %p128 = scmp.ne.s32.totalorder %s117, %s120
      %p129 = scmp.eq.s32.totalorder %s20, 3
      %p130 = por %p128, %p129
      %p131 = scmp.ne.s32.totalorder %s120, %s121
      %p132 = scmp.eq.s32.totalorder %s20, 0
      %p133 = por %p131, %p132
      %p134 = scmp.ne.s32.totalorder %s120, %s121
      %p135 = scmp.eq.s32.totalorder %s21, 3
      %p136 = por %p134, %p135
      %p138 = scmp.ne.s32.totalorder %s121, %s137
      %p139 = scmp.eq.s32.totalorder %s21, 0
      %p140 = por %p138, %p139
      %p141 = scmp.le.s32.totalorder 1, %s15
      %p142 = scmp.lt.s32.totalorder %s15, 5
      %p143 = pnand %p141, %p142
      %p144 = pneg %p143
      // Predicated region
      $region9: #{_propagation_layers.5} parent=5 // pred_check
        _
      $region10: #{_propagation_layers.5} parent=5 // pred_check_branch
        %146 = sbr.rel (%p143) target = $region12
      $region11: #{_propagation_layers.5} parent=5 // pred_region
        %s147 = ssub.s32 %s15, 1
      $region12: #{_propagation_layers.5} parent=5 // pred_fallthru
        _
      %p148 = scmp.lt.s32.totalorder %s15, 4
      // Predicated region
      $region13: #{_propagation_layers.5} parent=5 // pred_check
        %p149 = pneg %p148
      $region14: #{_propagation_layers.5} parent=5 // pred_check_branch
        %151 = sbr.rel (%p149) target = $region16
      $region15: #{_propagation_layers.5} parent=5 // pred_region
        // Predicated region
        $region17: #{_propagation_layers.5} parent=15 // pred_check
          %p152 = pneg %p49
        $region18: #{_propagation_layers.5} parent=15 // pred_check_branch
          %154 = sbr.rel (%p152) target = $region20
        $region19: #{_propagation_layers.5} parent=15 // pred_region
          %s155 = sand.u32 %s39, 1
          %s156 = sand.u32 %s39, 1
          %s157 = smul.addr %s156, 64
          %s158 = scalar_lea.vmem [#allocation3], %s157
          %s159 = smul.u32 16, %s22
          %s160 = smul.addr %s159, 2
          %s161 = sadd.s32 %s23, %s160
          %s162 = smul.addr %s161, 4
          %s163 = scalar_lea.vmem %s0, %s162
          // Predicated region
          $region21: #{_propagation_layers.5} parent=19 // pred_check
            _
          $region22: #{_propagation_layers.5} parent=19 // pred_check_branch
            %165 = sbr.rel (0) target = $region24
          $region23: #{_propagation_layers.5} parent=19 // pred_region
            // Predicated region
            $region25: #{_propagation_layers.5} parent=23 // pred_check
              _
            $region26: #{_propagation_layers.5} parent=23 // pred_check_branch
              %167 = sbr.rel target = $region28
            $region27: #{_propagation_layers.5} parent=23 // pred_region
              // Predicated region
              $region40: #{_propagation_layers.5} parent=27 // pred_check
                _
              $region41: #{_propagation_layers.5} parent=27 // pred_check_branch
                %212 = sbr.rel (0) target = $region43
              $region42: #{_propagation_layers.5} parent=27 // pred_region
                loop: start=0, step=1, limit=1
                $region44: #{_propagation_layers.5} parent=42 // loop_pre_header
                  _
                $region45: #{_propagation_layers.5} parent=42 // loop_header
                  %s214 = sphi 0, %s218
                  %p215 = scmp.ge.s32.totalorder %s214, 1
                  %s219 = sphi %s163, %s163
                  %s220 = sphi %s158, %s158
                $region46: #{_propagation_layers.5} parent=42 // loop_header_branch
                  %217 = sbr.rel (%p215) target = $region50
                $region47: #{_propagation_layers.5} parent=42 // loop_body
                  _
                $region48: #{_propagation_layers.5} parent=42 // loop_footer
                  %s218 = sadd.s32 1, %s214
                $region49: #{_propagation_layers.5} parent=42 // loop_footer_branch
                  %213 = sbr.rel target = $region45
                $region50: #{_propagation_layers.5} parent=42 // loop_exit
                  _
                loop: start=0, step=1, limit=1
                $region51: #{_propagation_layers.5} parent=42 // loop_pre_header
                  _
                $region52: #{_propagation_layers.5} parent=42 // loop_header
                  %s223 = sphi 0, %s227
                  %p224 = scmp.ge.s32.totalorder %s223, 1
                  %s228 = sphi %s163, %s163
                  %s229 = sphi %s158, %s158
                $region53: #{_propagation_layers.5} parent=42 // loop_header_branch
                  %226 = sbr.rel (%p224) target = $region57
                $region54: #{_propagation_layers.5} parent=42 // loop_body
                  %v230 = vld [vmem:[%s228] sm:$0xf]
                  %231 = vst [vmem:[%s229] sm:$0xf] %v230
                  %v232 = vld [vmem:[%s228 + $0x8] sm:$0xf]
                  %233 = vst [vmem:[%s229 + $0x4] sm:$0xf] %v232
                  %v234 = vld [vmem:[%s228 + $0x10] sm:$0xf]
                  %235 = vst [vmem:[%s229 + $0x8] sm:$0xf] %v234
                  %v236 = vld [vmem:[%s228 + $0x18] sm:$0xf]
                  %237 = vst [vmem:[%s229 + $0xc] sm:$0xf] %v236
                  %v238 = vld [vmem:[%s228 + $0x20] sm:$0xf]
                  %239 = vst [vmem:[%s229 + $0x10] sm:$0xf] %v238
                  %v240 = vld [vmem:[%s228 + $0x28] sm:$0xf]
                  %241 = vst [vmem:[%s229 + $0x14] sm:$0xf] %v240
                  %v242 = vld [vmem:[%s228 + $0x30] sm:$0xf]
                  %243 = vst [vmem:[%s229 + $0x18] sm:$0xf] %v242
                  %v244 = vld [vmem:[%s228 + $0x38] sm:$0xf]
                  %245 = vst [vmem:[%s229 + $0x1c] sm:$0xf] %v244
                  %v246 = vld [vmem:[%s228 + $0x40] sm:$0xf]
                  %247 = vst [vmem:[%s229 + $0x20] sm:$0xf] %v246
                  %v248 = vld [vmem:[%s228 + $0x48] sm:$0xf]
                  %249 = vst [vmem:[%s229 + $0x24] sm:$0xf] %v248
                  %v250 = vld [vmem:[%s228 + $0x50] sm:$0xf]
                  %251 = vst [vmem:[%s229 + $0x28] sm:$0xf] %v250
                  %v252 = vld [vmem:[%s228 + $0x58] sm:$0xf]
                  %253 = vst [vmem:[%s229 + $0x2c] sm:$0xf] %v252
                  %v254 = vld [vmem:[%s228 + $0x60] sm:$0xf]
                  %255 = vst [vmem:[%s229 + $0x30] sm:$0xf] %v254
                  %v256 = vld [vmem:[%s228 + $0x68] sm:$0xf]
                  %257 = vst [vmem:[%s229 + $0x34] sm:$0xf] %v256
                  %v258 = vld [vmem:[%s228 + $0x70] sm:$0xf]
                  %259 = vst [vmem:[%s229 + $0x38] sm:$0xf] %v258
                  %v260 = vld [vmem:[%s228 + $0x78] sm:$0xf]
                  %261 = vst [vmem:[%s229 + $0x3c] sm:$0xf] %v260
                $region55: #{_propagation_layers.5} parent=42 // loop_footer
                  %s227 = sadd.s32 1, %s223
                $region56: #{_propagation_layers.5} parent=42 // loop_footer_branch
                  %222 = sbr.rel target = $region52
                $region57: #{_propagation_layers.5} parent=42 // loop_exit
                  _
              $region43: #{_propagation_layers.5} parent=27 // pred_fallthru
                _
            $region28: #{_propagation_layers.5} parent=23 // pred_fallthru
              _
            // Predicated region
            $region29: #{_propagation_layers.5} parent=23 // pred_check
              _
            $region30: #{_propagation_layers.5} parent=23 // pred_check_branch
              %169 = sbr.rel (0) target = $region32
            $region31: #{_propagation_layers.5} parent=23 // pred_region
              loop: start=0, step=1, limit=1
              $region33: #{_propagation_layers.5} parent=31 // loop_pre_header
                _
              $region34: #{_propagation_layers.5} parent=31 // loop_header
                %s172 = sphi 0, %s176
                %p173 = scmp.ge.s32.totalorder %s172, 1
                %s177 = sphi %s163, %s163
                %s178 = sphi %s158, %s158
              $region35: #{_propagation_layers.5} parent=31 // loop_header_branch
                %175 = sbr.rel (%p173) target = $region39
              $region36: #{_propagation_layers.5} parent=31 // loop_body
                %v179 = vld [vmem:[%s177] sm:$0xf]
                %180 = vst [vmem:[%s178] sm:$0xf] %v179
                %v181 = vld [vmem:[%s177 + $0x8] sm:$0xf]
                %182 = vst [vmem:[%s178 + $0x4] sm:$0xf] %v181
                %v183 = vld [vmem:[%s177 + $0x10] sm:$0xf]
                %184 = vst [vmem:[%s178 + $0x8] sm:$0xf] %v183
                %v185 = vld [vmem:[%s177 + $0x18] sm:$0xf]
                %186 = vst [vmem:[%s178 + $0xc] sm:$0xf] %v185
                %v187 = vld [vmem:[%s177 + $0x20] sm:$0xf]
                %188 = vst [vmem:[%s178 + $0x10] sm:$0xf] %v187
                %v189 = vld [vmem:[%s177 + $0x28] sm:$0xf]
                %190 = vst [vmem:[%s178 + $0x14] sm:$0xf] %v189
                %v191 = vld [vmem:[%s177 + $0x30] sm:$0xf]
                %192 = vst [vmem:[%s178 + $0x18] sm:$0xf] %v191
                %v193 = vld [vmem:[%s177 + $0x38] sm:$0xf]
                %194 = vst [vmem:[%s178 + $0x1c] sm:$0xf] %v193
                %v195 = vld [vmem:[%s177 + $0x40] sm:$0xf]
                %196 = vst [vmem:[%s178 + $0x20] sm:$0xf] %v195
                %v197 = vld [vmem:[%s177 + $0x48] sm:$0xf]
                %198 = vst [vmem:[%s178 + $0x24] sm:$0xf] %v197
                %v199 = vld [vmem:[%s177 + $0x50] sm:$0xf]
                %200 = vst [vmem:[%s178 + $0x28] sm:$0xf] %v199
                %v201 = vld [vmem:[%s177 + $0x58] sm:$0xf]
                %202 = vst [vmem:[%s178 + $0x2c] sm:$0xf] %v201
                %v203 = vld [vmem:[%s177 + $0x60] sm:$0xf]
                %204 = vst [vmem:[%s178 + $0x30] sm:$0xf] %v203
                %v205 = vld [vmem:[%s177 + $0x68] sm:$0xf]
                %206 = vst [vmem:[%s178 + $0x34] sm:$0xf] %v205
                %v207 = vld [vmem:[%s177 + $0x70] sm:$0xf]
                %208 = vst [vmem:[%s178 + $0x38] sm:$0xf] %v207
                %v209 = vld [vmem:[%s177 + $0x78] sm:$0xf]
                %210 = vst [vmem:[%s178 + $0x3c] sm:$0xf] %v209
              $region37: #{_propagation_layers.5} parent=31 // loop_footer
                %s176 = sadd.s32 1, %s172
              $region38: #{_propagation_layers.5} parent=31 // loop_footer_branch
                %171 = sbr.rel target = $region34
              $region39: #{_propagation_layers.5} parent=31 // loop_exit
                _
            $region32: #{_propagation_layers.5} parent=23 // pred_fallthru
              _
          $region24: #{_propagation_layers.5} parent=19 // pred_fallthru
            _
          %262 = vnop
        $region20: #{_propagation_layers.5} parent=15 // pred_fallthru
          _
        // Predicated region
        $region58: #{_propagation_layers.5} parent=15 // pred_check
          %p263 = pneg %p75
        $region59: #{_propagation_layers.5} parent=15 // pred_check_branch
          %265 = sbr.rel (%p263) target = $region61
        $region60: #{_propagation_layers.5} parent=15 // pred_region
          %s266 = smul.u32 16, %s23
          %p267 = scmp.lt.s32.totalorder %s266, 31
          %s268 = scalar_select %p267, %s266, 31
          %s269 = smul.addr %s268, 4
          %s270 = scalar_lea.vmem %s1, %s269
          %s271 = smul.u32 16, %s23
        $region61: #{_propagation_layers.5} parent=15 // pred_fallthru
          _
        // Predicated region
        $region62: #{_propagation_layers.5} parent=15 // pred_check
          %p272 = pneg %p101
        $region63: #{_propagation_layers.5} parent=15 // pred_check_branch
          %274 = sbr.rel (%p272) target = $region65
        $region64: #{_propagation_layers.5} parent=15 // pred_region
          %s275 = sand.u32 %s91, 1
          %s276 = scalar_lea.sflag [#allocation5], %s275
          %s277 = sand.u32 %s91, 1
          %s278 = smul.addr %s277, 128
          %s279 = scalar_lea.vmem [#allocation4], %s278
          %s280 = smul.u32 16, %s22
          %s282 = ssub.s32 2048, 2048
          %283 = vsyncadd %s276, %s282
          %s284 = smul.addr %s280, 128
          %s285 = scalar_lea.hbm %s2, %s284
          %s286 = sshll.u32 %s279, 4
          %s287 = int_to_ptr.vmem [resolvable:$true] %s286
          %292 = dma.hbm_to_vmem [thread:$0]  %s285, 2048, %s287, %s276, 128, 128, 8
        $region65: #{_propagation_layers.5} parent=15 // pred_fallthru
          _
      $region16: #{_propagation_layers.5} parent=5 // pred_fallthru
        _
      %p293 = scmp.le.s32.totalorder 1, %s15
      %p294 = scmp.lt.s32.totalorder %s15, 5
      %p295 = pnand %p293, %p294
      %p296 = pneg %p295
      // Predicated region
      $region66: #{_propagation_layers.5} parent=5 // pred_check
        _
      $region67: #{_propagation_layers.5} parent=5 // pred_check_branch
        %298 = sbr.rel (%p295) target = $region69
      $region68: #{_propagation_layers.5} parent=5 // pred_region
        %s299 = ssub.s32 %s15, 1
        %s300 = sand.u32 %s42, 1
        %s301 = sand.u32 %s42, 1
        %s302 = smul.addr %s301, 64
        %s303 = scalar_lea.vmem [#allocation3], %s302
        // Predicated region
        $region70: #{_propagation_layers.5} parent=68 // pred_check
          %p304 = pneg %p55
        $region71: #{_propagation_layers.5} parent=68 // pred_check_branch
          %306 = sbr.rel (%p304) target = $region73
        $region72: #{_propagation_layers.5} parent=68 // pred_region
          _
        $region73: #{_propagation_layers.5} parent=68 // pred_fallthru
          _
        %s307 = sand.u32 %s94, 1
        %s308 = scalar_lea.sflag [#allocation5], %s307
        %s309 = sand.u32 %s94, 1
        %s310 = smul.addr %s309, 128
        %s311 = scalar_lea.vmem [#allocation4], %s310
        // Predicated region
        $region74: #{_propagation_layers.5} parent=68 // pred_check
          %p312 = pneg %p107
        $region75: #{_propagation_layers.5} parent=68 // pred_check_branch
          %314 = sbr.rel (%p312) target = $region77
        $region76: #{_propagation_layers.5} parent=68 // pred_region
          %315 = dma.done %s308, 2048
        $region77: #{_propagation_layers.5} parent=68 // pred_fallthru
          _
        %s316 = sand.u32 %s42, 1
        %s317 = sand.u32 %s42, 1
        %s318 = smul.addr %s317, 64
        %s319 = scalar_lea.vmem [#allocation3], %s318
        %p320 = pneg %p55
        %p321 = pneg %p52
        %s322 = smul.u32 16, %s25
        %p323 = scmp.lt.s32.totalorder %s322, 31
        %s324 = scalar_select %p323, %s322, 31
        %s325 = smul.addr %s324, 4
        %s326 = scalar_lea.vmem %s1, %s325
        %p327 = pneg %p81
        %p328 = pneg %p78
        %s329 = sand.u32 %s94, 1
        %s330 = scalar_lea.sflag [#allocation5], %s329
        %s331 = sand.u32 %s94, 1
        %s332 = smul.addr %s331, 128
        %s333 = scalar_lea.vmem [#allocation4], %s332
        %p334 = pneg %p107
        %p335 = pneg %p104
        %p336 = pneg %p133
        %p337 = pneg %p130
        %s338 = sand.u32 %s120, 1
        %s339 = scalar_lea.sflag [#allocation6], %s338
        %s340 = sand.u32 %s120, 1
        %s341 = smul.addr %s340, 128
        %s342 = scalar_lea.vmem [#allocation7], %s341
        %s343 = smul.u32 16, %s24
        %s344 = smul.u32 16, %s25
        %p345 = scmp.lt.s32.totalorder %s344, 31
        %s346 = scalar_select %p345, %s344, 31
        %s347 = smul.addr %s346, 4
        %s348 = scalar_lea.vmem %s1, %s347
        %s349 = smul.u32 16, %s25
        %s350 = smul.u32 16, %s24
        %s351 = smul.u32 16, %s24
        %p353 = scmp.eq.s32.totalorder %s25, 0
        // Predicated region
        $region78: #{_propagation_layers.5} parent=68 // pred_check
          %p354 = pneg %p353
        $region79: #{_propagation_layers.5} parent=68 // pred_check_branch
          %356 = sbr.rel (%p354) target = $region81
        $region80: #{_propagation_layers.5} parent=68 // pred_region
          %357 = vst [vmem:[#allocation2] sm:$0xff] 0.0
          %358 = vst [vmem:[#allocation2 + $0x8] sm:$0xff] 0.0
          %359 = vst [vmem:[#allocation2 + $0x10] sm:$0xff] 0.0
          %360 = vst [vmem:[#allocation2 + $0x18] sm:$0xff] 0.0
          %361 = vst [vmem:[#allocation2 + $0x20] sm:$0xff] 0.0
          %362 = vst [vmem:[#allocation2 + $0x28] sm:$0xff] 0.0
          %363 = vst [vmem:[#allocation2 + $0x30] sm:$0xff] 0.0
          %364 = vst [vmem:[#allocation2 + $0x38] sm:$0xff] 0.0
          %365 = vst [vmem:[#allocation2 + $0x40] sm:$0xff] 0.0
          %366 = vst [vmem:[#allocation2 + $0x48] sm:$0xff] 0.0
          %367 = vst [vmem:[#allocation2 + $0x50] sm:$0xff] 0.0
          %368 = vst [vmem:[#allocation2 + $0x58] sm:$0xff] 0.0
          %369 = vst [vmem:[#allocation2 + $0x60] sm:$0xff] 0.0
          %370 = vst [vmem:[#allocation2 + $0x68] sm:$0xff] 0.0
          %371 = vst [vmem:[#allocation2 + $0x70] sm:$0xff] 0.0
          %372 = vst [vmem:[#allocation2 + $0x78] sm:$0xff] 0.0
        $region81: #{_propagation_layers.5} parent=68 // pred_fallthru
          _
        %v373 = vld [vmem:[#allocation2] sm:$0xff]
        %v374 = vld [vmem:[#allocation2 + $0x8] sm:$0xff]
        %v375 = vld [vmem:[#allocation2 + $0x10] sm:$0xff]
        %v376 = vld [vmem:[#allocation2 + $0x18] sm:$0xff]
        %v377 = vld [vmem:[#allocation2 + $0x20] sm:$0xff]
        %v378 = vld [vmem:[#allocation2 + $0x28] sm:$0xff]
        %v379 = vld [vmem:[#allocation2 + $0x30] sm:$0xff]
        %v380 = vld [vmem:[#allocation2 + $0x38] sm:$0xff]
        %v381 = vld [vmem:[#allocation2 + $0x40] sm:$0xff]
        %v382 = vld [vmem:[#allocation2 + $0x48] sm:$0xff]
        %v383 = vld [vmem:[#allocation2 + $0x50] sm:$0xff]
        %v384 = vld [vmem:[#allocation2 + $0x58] sm:$0xff]
        %v385 = vld [vmem:[#allocation2 + $0x60] sm:$0xff]
        %v386 = vld [vmem:[#allocation2 + $0x68] sm:$0xff]
        %v387 = vld [vmem:[#allocation2 + $0x70] sm:$0xff]
        %v388 = vld [vmem:[#allocation2 + $0x78] sm:$0xff]
        %v389 = vld [vmem:[%s303] sm:$0xf]
        %v390 = vld [vmem:[%s303 + $0x4] sm:$0xf]
        %v391 = vld [vmem:[%s303 + $0x8] sm:$0xf]
        %v392 = vld [vmem:[%s303 + $0xc] sm:$0xf]
        %v393 = vld [vmem:[%s303 + $0x10] sm:$0xf]
        %v394 = vld [vmem:[%s303 + $0x14] sm:$0xf]
        %v395 = vld [vmem:[%s303 + $0x18] sm:$0xf]
        %v396 = vld [vmem:[%s303 + $0x1c] sm:$0xf]
        %v397 = vld [vmem:[%s303 + $0x20] sm:$0xf]
        %v398 = vld [vmem:[%s303 + $0x24] sm:$0xf]
        %v399 = vld [vmem:[%s303 + $0x28] sm:$0xf]
        %v400 = vld [vmem:[%s303 + $0x2c] sm:$0xf]
        %v401 = vld [vmem:[%s303 + $0x30] sm:$0xf]
        %v402 = vld [vmem:[%s303 + $0x34] sm:$0xf]
        %v403 = vld [vmem:[%s303 + $0x38] sm:$0xf]
        %v404 = vld [vmem:[%s303 + $0x3c] sm:$0xf]
        %v405 = vld [vmem:[%s348] sm:$0xf]
        %v406 = vld [vmem:[%s348 + $0x4] sm:$0xf]
        %v407 = vld [vmem:[%s348 + $0x8] sm:$0xf]
        %v408 = vld [vmem:[%s348 + $0xc] sm:$0xf]
        %v409 = vld [vmem:[%s348 + $0x10] sm:$0xf]
        %v410 = vld [vmem:[%s348 + $0x14] sm:$0xf]
        %v411 = vld [vmem:[%s348 + $0x18] sm:$0xf]
        %v412 = vld [vmem:[%s348 + $0x1c] sm:$0xf]
        %v413 = vld [vmem:[%s348 + $0x20] sm:$0xf]
        %v414 = vld [vmem:[%s348 + $0x24] sm:$0xf]
        %v415 = vld [vmem:[%s348 + $0x28] sm:$0xf]
        %v416 = vld [vmem:[%s348 + $0x2c] sm:$0xf]
        %v417 = vld [vmem:[%s348 + $0x30] sm:$0xf]
        %v418 = vld [vmem:[%s348 + $0x34] sm:$0xf]
        %v419 = vld [vmem:[%s348 + $0x38] sm:$0xf]
        %v420 = vld [vmem:[%s348 + $0x3c] sm:$0xf]
        %v437 = vunpack.c.l.b16 %v389
        %v438 = vunpack.c.l.b16 %v390
        %v439 = vunpack.c.l.b16 %v391
        %v440 = vunpack.c.l.b16 %v392
        %v441 = vunpack.c.l.b16 %v393
        %v442 = vunpack.c.l.b16 %v394
        %v443 = vunpack.c.l.b16 %v395
        %v444 = vunpack.c.l.b16 %v396
        %v445 = vunpack.c.l.b16 %v397
        %v446 = vunpack.c.l.b16 %v398
        %v447 = vunpack.c.l.b16 %v399
        %v448 = vunpack.c.l.b16 %v400
        %v449 = vunpack.c.l.b16 %v401
        %v450 = vunpack.c.l.b16 %v402
        %v451 = vunpack.c.l.b16 %v403
        %v452 = vunpack.c.l.b16 %v404
        %v453 = vpack.c.b16 %v438, %v437
        %v454 = vpack.c.b16 %v440, %v439
        %v455 = vpack.c.b16 %v442, %v441
        %v456 = vpack.c.b16 %v444, %v443
        %v457 = vpack.c.b16 %v446, %v445
        %v458 = vpack.c.b16 %v448, %v447
        %v459 = vpack.c.b16 %v450, %v449
        %v460 = vpack.c.b16 %v452, %v451
        %v485 = vunpack.c.l.b16 %v405
        %v486 = vunpack.c.l.b16 %v406
        %v487 = vunpack.c.l.b16 %v407
        %v488 = vunpack.c.l.b16 %v408
        %v489 = vunpack.c.l.b16 %v409
        %v490 = vunpack.c.l.b16 %v410
        %v491 = vunpack.c.l.b16 %v411
        %v492 = vunpack.c.l.b16 %v412
        %v493 = vunpack.c.l.b16 %v413
        %v494 = vunpack.c.l.b16 %v414
        %v495 = vunpack.c.l.b16 %v415
        %v496 = vunpack.c.l.b16 %v416
        %v497 = vunpack.c.l.b16 %v417
        %v498 = vunpack.c.l.b16 %v418
        %v499 = vunpack.c.l.b16 %v419
        %v500 = vunpack.c.l.b16 %v420
        %v501 = vpack.c.b16 %v486, %v485
        %v502 = vpack.c.b16 %v488, %v487
        %v503 = vpack.c.b16 %v490, %v489
        %v504 = vpack.c.b16 %v492, %v491
        %v505 = vpack.c.b16 %v494, %v493
        %v506 = vpack.c.b16 %v496, %v495
        %v507 = vpack.c.b16 %v498, %v497
        %v508 = vpack.c.b16 %v500, %v499
        %517 = vmatprep.subr.bf16.mxu0 0
        %518 = vmatpush1.bf16.msra.mxu0 %v501
        %519 = vmatprep.subr.bf16.mxu0 0
        %520 = vmatpush1.bf16.msra.mxu0 %v502
        %521 = vmatprep.subr.bf16.mxu0 0
        %522 = vmatpush1.bf16.msra.mxu0 %v503
        %523 = vmatprep.subr.bf16.mxu0 0
        %524 = vmatpush1.bf16.msra.mxu0 %v504
        %525 = vmatprep.subr.bf16.mxu0 0
        %526 = vmatpush1.bf16.msra.mxu0 %v505
        %527 = vmatprep.subr.bf16.mxu0 0
        %528 = vmatpush1.bf16.msra.mxu0 %v506
        %529 = vmatprep.subr.bf16.mxu0 0
        %530 = vmatpush1.bf16.msra.mxu0 %v507
        %531 = vmatprep.subr.bf16.mxu0 0
        %532 = vmatpush1.bf16.msra.mxu0 %v508
        %533 = vmatprep.subr.bf16.mxu0 0
        %534 = vmatpush1.bf16.msra.mxu0 0
        %535 = vmatprep.subr.bf16.mxu0 0
        %536 = vmatpush1.bf16.msra.mxu0 0
        %537 = vmatprep.subr.bf16.mxu0 0
        %538 = vmatpush1.bf16.msra.mxu0 0
        %539 = vmatprep.subr.bf16.mxu0 0
        %540 = vmatpush1.bf16.msra.mxu0 0
        %541 = vmatprep.subr.bf16.mxu0 0
        %542 = vmatpush1.bf16.msra.mxu0 0
        %543 = vmatprep.subr.bf16.mxu0 0
        %544 = vmatpush1.bf16.msra.mxu0 0
        %545 = vmatprep.subr.bf16.mxu0 0
        %546 = vmatpush1.bf16.msra.mxu0 0
        %547 = vmatprep.subr.bf16.mxu0 0
        %548 = vmatpush1.bf16.msra.mxu0 0
        %549 = vmatprep.mubr.bf16.mxu0 0
        %550 = vmatmul.mubr.bf16.gmra.mrb[0].mxu0 %v453
        %v551 = vpop.f32.mrb[0].mxu0
        %v552 = vadd.f32 0.0, %v551
        %v553 = vpop.f32.mrb[0].mxu0
        %v554 = vpop.f32.mrb[0].mxu0
        %v555 = vadd.f32 0.0, %v554
        %v556 = vpop.f32.mrb[0].mxu0
        %557 = vmatprep.mubr.bf16.mxu0 0
        %558 = vmatmul.mubr.bf16.gmra.mrb[0].mxu0 %v454
        %v559 = vpop.f32.mrb[0].mxu0
        %v560 = vadd.f32 0.0, %v559
        %v561 = vpop.f32.mrb[0].mxu0
        %v562 = vpop.f32.mrb[0].mxu0
        %v563 = vadd.f32 0.0, %v562
        %v564 = vpop.f32.mrb[0].mxu0
        %565 = vmatprep.mubr.bf16.mxu0 0
        %566 = vmatmul.mubr.bf16.gmra.mrb[0].mxu0 %v455
        %v567 = vpop.f32.mrb[0].mxu0
        %v568 = vadd.f32 0.0, %v567
        %v569 = vpop.f32.mrb[0].mxu0
        %v570 = vpop.f32.mrb[0].mxu0
        %v571 = vadd.f32 0.0, %v570
        %v572 = vpop.f32.mrb[0].mxu0
        %573 = vmatprep.mubr.bf16.mxu0 0
        %574 = vmatmul.mubr.bf16.gmra.mrb[0].mxu0 %v456
        %v575 = vpop.f32.mrb[0].mxu0
        %v576 = vadd.f32 0.0, %v575
        %v577 = vpop.f32.mrb[0].mxu0
        %v578 = vpop.f32.mrb[0].mxu0
        %v579 = vadd.f32 0.0, %v578
        %v580 = vpop.f32.mrb[0].mxu0
        %581 = vmatprep.mubr.bf16.mxu0 0
        %582 = vmatmul.mubr.bf16.gmra.mrb[0].mxu0 %v457
        %v583 = vpop.f32.mrb[0].mxu0
        %v584 = vadd.f32 0.0, %v583
        %v585 = vpop.f32.mrb[0].mxu0
        %v586 = vpop.f32.mrb[0].mxu0
        %v587 = vadd.f32 0.0, %v586
        %v588 = vpop.f32.mrb[0].mxu0
        %589 = vmatprep.mubr.bf16.mxu0 0
        %590 = vmatmul.mubr.bf16.gmra.mrb[0].mxu0 %v458
        %v591 = vpop.f32.mrb[0].mxu0
        %v592 = vadd.f32 0.0, %v591
        %v593 = vpop.f32.mrb[0].mxu0
        %v594 = vpop.f32.mrb[0].mxu0
        %v595 = vadd.f32 0.0, %v594
        %v596 = vpop.f32.mrb[0].mxu0
        %597 = vmatprep.mubr.bf16.mxu0 0
        %598 = vmatmul.mubr.bf16.gmra.mrb[0].mxu0 %v459
        %v599 = vpop.f32.mrb[0].mxu0
        %v600 = vadd.f32 0.0, %v599
        %v601 = vpop.f32.mrb[0].mxu0
        %v602 = vpop.f32.mrb[0].mxu0
        %v603 = vadd.f32 0.0, %v602
        %v604 = vpop.f32.mrb[0].mxu0
        %605 = vmatprep.mubr.bf16.mxu0 0
        %606 = vmatmul.mubr.bf16.gmra.mrb[0].mxu0 %v460
        %v607 = vpop.f32.mrb[0].mxu0
        %v608 = vadd.f32 0.0, %v607
        %v609 = vpop.f32.mrb[0].mxu0
        %v610 = vpop.f32.mrb[0].mxu0
        %v611 = vadd.f32 0.0, %v610
        %v612 = vpop.f32.mrb[0].mxu0
        %613 = vdwg.mxu0
        %v614 = vadd.f32 %v373, %v552
        %v615 = vadd.f32 %v374, %v555
        %v616 = vadd.f32 %v375, %v560
        %v617 = vadd.f32 %v376, %v563
        %v618 = vadd.f32 %v377, %v568
        %v619 = vadd.f32 %v378, %v571
        %v620 = vadd.f32 %v379, %v576
        %v621 = vadd.f32 %v380, %v579
        %v622 = vadd.f32 %v381, %v584
        %v623 = vadd.f32 %v382, %v587
        %v624 = vadd.f32 %v383, %v592
        %v625 = vadd.f32 %v384, %v595
        %v626 = vadd.f32 %v385, %v600
        %v627 = vadd.f32 %v386, %v603
        %v628 = vadd.f32 %v387, %v608
        %v629 = vadd.f32 %v388, %v611
        %630 = vst [vmem:[#allocation2] sm:$0xff] %v614
        %631 = vst [vmem:[#allocation2 + $0x8] sm:$0xff] %v615
        %632 = vst [vmem:[#allocation2 + $0x10] sm:$0xff] %v616
        %633 = vst [vmem:[#allocation2 + $0x18] sm:$0xff] %v617
        %634 = vst [vmem:[#allocation2 + $0x20] sm:$0xff] %v618
        %635 = vst [vmem:[#allocation2 + $0x28] sm:$0xff] %v619
        %636 = vst [vmem:[#allocation2 + $0x30] sm:$0xff] %v620
        %637 = vst [vmem:[#allocation2 + $0x38] sm:$0xff] %v621
        %638 = vst [vmem:[#allocation2 + $0x40] sm:$0xff] %v622
        %639 = vst [vmem:[#allocation2 + $0x48] sm:$0xff] %v623
        %640 = vst [vmem:[#allocation2 + $0x50] sm:$0xff] %v624
        %641 = vst [vmem:[#allocation2 + $0x58] sm:$0xff] %v625
        %642 = vst [vmem:[#allocation2 + $0x60] sm:$0xff] %v626
        %643 = vst [vmem:[#allocation2 + $0x68] sm:$0xff] %v627
        %644 = vst [vmem:[#allocation2 + $0x70] sm:$0xff] %v628
        %645 = vst [vmem:[#allocation2 + $0x78] sm:$0xff] %v629
        %p646 = scmp.eq.s32.totalorder %s25, 1
        // Predicated region
        $region82: #{_propagation_layers.5} parent=68 // pred_check
          %p647 = pneg %p646
        $region83: #{_propagation_layers.5} parent=68 // pred_check_branch
          %649 = sbr.rel (%p647) target = $region85
        $region84: #{_propagation_layers.5} parent=68 // pred_region
          %v650 = vld [vmem:[%s311] sm:$0xff]
          %v651 = vld [vmem:[%s311 + $0x8] sm:$0xff]
          %v652 = vld [vmem:[%s311 + $0x10] sm:$0xff]
          %v653 = vld [vmem:[%s311 + $0x18] sm:$0xff]
          %v654 = vld [vmem:[%s311 + $0x20] sm:$0xff]
          %v655 = vld [vmem:[%s311 + $0x28] sm:$0xff]
          %v656 = vld [vmem:[%s311 + $0x30] sm:$0xff]
          %v657 = vld [vmem:[%s311 + $0x38] sm:$0xff]
          %v658 = vld [vmem:[%s311 + $0x40] sm:$0xff]
          %v659 = vld [vmem:[%s311 + $0x48] sm:$0xff]
          %v660 = vld [vmem:[%s311 + $0x50] sm:$0xff]
          %v661 = vld [vmem:[%s311 + $0x58] sm:$0xff]
          %v662 = vld [vmem:[%s311 + $0x60] sm:$0xff]
          %v663 = vld [vmem:[%s311 + $0x68] sm:$0xff]
          %v664 = vld [vmem:[%s311 + $0x70] sm:$0xff]
          %v665 = vld [vmem:[%s311 + $0x78] sm:$0xff]
          %v666 = vld [vmem:[#allocation2] sm:$0xff]
          %v667 = vld [vmem:[#allocation2 + $0x8] sm:$0xff]
          %v668 = vld [vmem:[#allocation2 + $0x10] sm:$0xff]
          %v669 = vld [vmem:[#allocation2 + $0x18] sm:$0xff]
          %v670 = vld [vmem:[#allocation2 + $0x20] sm:$0xff]
          %v671 = vld [vmem:[#allocation2 + $0x28] sm:$0xff]
          %v672 = vld [vmem:[#allocation2 + $0x30] sm:$0xff]
          %v673 = vld [vmem:[#allocation2 + $0x38] sm:$0xff]
          %v674 = vld [vmem:[#allocation2 + $0x40] sm:$0xff]
          %v675 = vld [vmem:[#allocation2 + $0x48] sm:$0xff]
          %v676 = vld [vmem:[#allocation2 + $0x50] sm:$0xff]
          %v677 = vld [vmem:[#allocation2 + $0x58] sm:$0xff]
          %v678 = vld [vmem:[#allocation2 + $0x60] sm:$0xff]
          %v679 = vld [vmem:[#allocation2 + $0x68] sm:$0xff]
          %v680 = vld [vmem:[#allocation2 + $0x70] sm:$0xff]
          %v681 = vld [vmem:[#allocation2 + $0x78] sm:$0xff]
          %v682 = vadd.f32 %v650, %v666
          %v683 = vadd.f32 %v651, %v667
          %v684 = vadd.f32 %v652, %v668
          %v685 = vadd.f32 %v653, %v669
          %v686 = vadd.f32 %v654, %v670
          %v687 = vadd.f32 %v655, %v671
          %v688 = vadd.f32 %v656, %v672
          %v689 = vadd.f32 %v657, %v673
          %v690 = vadd.f32 %v658, %v674
          %v691 = vadd.f32 %v659, %v675
          %v692 = vadd.f32 %v660, %v676
          %v693 = vadd.f32 %v661, %v677
          %v694 = vadd.f32 %v662, %v678
          %v695 = vadd.f32 %v663, %v679
          %v696 = vadd.f32 %v664, %v680
          %v697 = vadd.f32 %v665, %v681
          %v698 = vmul.f32 %v682, 0.25
          %v699 = vmul.f32 %v683, 0.25
          %v700 = vmul.f32 %v684, 0.25
          %v701 = vmul.f32 %v685, 0.25
          %v702 = vmul.f32 %v686, 0.25
          %v703 = vmul.f32 %v687, 0.25
          %v704 = vmul.f32 %v688, 0.25
          %v705 = vmul.f32 %v689, 0.25
          %v706 = vmul.f32 %v690, 0.25
          %v707 = vmul.f32 %v691, 0.25
          %v708 = vmul.f32 %v692, 0.25
          %v709 = vmul.f32 %v693, 0.25
          %v710 = vmul.f32 %v694, 0.25
          %v711 = vmul.f32 %v695, 0.25
          %v712 = vmul.f32 %v696, 0.25
          %v713 = vmul.f32 %v697, 0.25
          %714 = vst [vmem:[%s342] sm:$0xff] %v698
          %715 = vst [vmem:[%s342 + $0x8] sm:$0xff] %v699
          %716 = vst [vmem:[%s342 + $0x10] sm:$0xff] %v700
          %717 = vst [vmem:[%s342 + $0x18] sm:$0xff] %v701
          %718 = vst [vmem:[%s342 + $0x20] sm:$0xff] %v702
          %719 = vst [vmem:[%s342 + $0x28] sm:$0xff] %v703
          %720 = vst [vmem:[%s342 + $0x30] sm:$0xff] %v704
          %721 = vst [vmem:[%s342 + $0x38] sm:$0xff] %v705
          %722 = vst [vmem:[%s342 + $0x40] sm:$0xff] %v706
          %723 = vst [vmem:[%s342 + $0x48] sm:$0xff] %v707
          %724 = vst [vmem:[%s342 + $0x50] sm:$0xff] %v708
          %725 = vst [vmem:[%s342 + $0x58] sm:$0xff] %v709
          %726 = vst [vmem:[%s342 + $0x60] sm:$0xff] %v710
          %727 = vst [vmem:[%s342 + $0x68] sm:$0xff] %v711
          %728 = vst [vmem:[%s342 + $0x70] sm:$0xff] %v712
          %729 = vst [vmem:[%s342 + $0x78] sm:$0xff] %v713
        $region85: #{_propagation_layers.5} parent=68 // pred_fallthru
          _
        %s730 = sand.u32 %s120, 1
        %s731 = scalar_lea.sflag [#allocation6], %s730
        %s732 = sand.u32 %s120, 1
        %s733 = smul.addr %s732, 128
        %s734 = scalar_lea.vmem [#allocation7], %s733
        // Predicated region
        $region86: #{_propagation_layers.5} parent=68 // pred_check
          %p735 = pneg %p130
        $region87: #{_propagation_layers.5} parent=68 // pred_check_branch
          %737 = sbr.rel (%p735) target = $region89
        $region88: #{_propagation_layers.5} parent=68 // pred_region
          %s738 = smul.u32 16, %s24
          %s740 = ssub.s32 2048, 2048
          %741 = vsyncadd %s731, %s740
          %s742 = smul.addr %s738, 128
          %s743 = scalar_lea.hbm %s3, %s742
          %s744 = sshll.u32 %s734, 4
          %s745 = int_to_ptr.vmem [resolvable:$true] %s744
          %750 = dma.vmem_to_hbm [thread:$0]  %s745, 2048, %s743, %s731, 128, 128, 8
        $region89: #{_propagation_layers.5} parent=68 // pred_fallthru
          _
      $region69: #{_propagation_layers.5} parent=5 // pred_fallthru
        _
      %p751 = scmp.le.s32.totalorder 2, %s15
      // Predicated region
      $region90: #{_propagation_layers.5} parent=5 // pred_check
        %p752 = pneg %p751
      $region91: #{_propagation_layers.5} parent=5 // pred_check_branch
        %754 = sbr.rel (%p752) target = $region93
      $region92: #{_propagation_layers.5} parent=5 // pred_region
        %s755 = ssub.s32 %s15, 2
        // Predicated region
        $region94: #{_propagation_layers.5} parent=92 // pred_check
          %p756 = pneg %p136
        $region95: #{_propagation_layers.5} parent=92 // pred_check_branch
          %758 = sbr.rel (%p756) target = $region97
        $region96: #{_propagation_layers.5} parent=92 // pred_region
          %s759 = sand.u32 %s121, 1
          %s760 = scalar_lea.sflag [#allocation6], %s759
          %s761 = sand.u32 %s121, 1
          %s762 = smul.addr %s761, 128
          %s763 = scalar_lea.vmem [#allocation7], %s762
          %764 = dma.done %s760, 2048
        $region97: #{_propagation_layers.5} parent=92 // pred_fallthru
          _
      $region93: #{_propagation_layers.5} parent=5 // pred_fallthru
        _
    $region6: #{_propagation_layers.5} parent=1 // loop_footer
      %s19 = sadd.s32 1, %s15
    $region7: #{_propagation_layers.5} parent=1 // loop_footer_branch
      %14 = sbr.rel target = $region3
    $region8: #{_propagation_layers.5} parent=1 // loop_exit
      _
    %765 = vsyncpa [#allocation5], 1
    %s766 = scalar_lea.sflag [#allocation5], 1
    %767 = vsyncpa %s766, 1
    %768 = vsyncpa [#allocation6], 1
    %s769 = scalar_lea.sflag [#allocation6], 1
    %770 = vsyncpa %s769, 1

</llo_original>
